<compile_context>
chip_gen: v7x
topology: tpu7x:2x2x1
jax: 0.10.0
libtpu: 0.0.40
codegen_flags: <defaults>
</compile_context>

<pallas_src>
import jax
import jax.numpy as jnp
from jax.experimental import pallas as pl
from jax.experimental.pallas import tpu as pltpu

EP = 64        # embedding dim padded to 64 (2 * EP = 128 = fc1 K)
HIDDEN = 128   # fc1 output features
TB = 512       # batch tile rows per grid step (multiple of 8 and 128)


def ncf_mlp_kernel(u_ref, i_ref, w1u_ref, w1i_ref, b1_ref, w2_ref, b2_ref, o_ref):
    """Fused fc1 + relu + fc2 for one batch tile.

    u_ref  : (TB, EP)   bf16 user embeddings (zero-padded cols)
    i_ref  : (TB, EP)   bf16 item embeddings
    w1u_ref: (EP, 128)  bf16 fc1 weight rows for the user half
    w1i_ref: (EP, 128)  bf16 fc1 weight rows for the item half
    b1_ref : (1, 128)   f32 fc1 bias
    w2_ref : (128, 1)   f32 fc2 weight column
    b2_ref : (1, 1)     f32 fc2 bias (SMEM scalar)
    o_ref  : (1, TB)    f32 lane-dense scores for this tile
    """
    # fc1 split over the two embeddings (no concat); bf16 MXU, f32 accumulation.
    h = jnp.dot(u_ref[...], w1u_ref[...], preferred_element_type=jnp.float32)
    h = h + jnp.dot(i_ref[...], w1i_ref[...], preferred_element_type=jnp.float32)
    h = jnp.maximum(h + b1_ref[...], 0.0)                      # (TB, 128) f32, VPU

    # fc2 (out_features = 1): VPU multiply + reduction instead of an N=1 matmul.
    # Transpose h (XLU) so the reduce runs over sublanes and the result is a
    # lane-dense (1, TB) row that stores with full-width vst.
    ht = h.T                                                    # (128, TB) f32
    s = jnp.sum(ht * w2_ref[...], axis=0, keepdims=True)        # (1, TB) f32
    o_ref[...] = (s + b2_ref[0, 0]).astype(o_ref.dtype)


def init_params(key, num_users, num_items, embedding_dim=50, hidden=HIDDEN):
    """Reference (PyTorch-equivalent) f32 parameters."""
    k_ue, k_ie, k_w1, k_b1, k_w2, k_b2 = jax.random.split(key, 6)
    in1 = embedding_dim * 2
    return {
        # nn.Embedding default init: N(0, 1)
        "user_emb": jax.random.normal(k_ue, (num_users, embedding_dim), jnp.float32),
        "item_emb": jax.random.normal(k_ie, (num_items, embedding_dim), jnp.float32),
        # nn.Linear default init: U(-1/sqrt(fan_in), 1/sqrt(fan_in)); stored (in, out)
        "w1": jax.random.uniform(k_w1, (in1, hidden), jnp.float32,
                                 -1.0 / jnp.sqrt(in1), 1.0 / jnp.sqrt(in1)),
        "b1": jax.random.uniform(k_b1, (hidden,), jnp.float32,
                                 -1.0 / jnp.sqrt(in1), 1.0 / jnp.sqrt(in1)),
        "w2": jax.random.uniform(k_w2, (hidden, 1), jnp.float32,
                                 -1.0 / jnp.sqrt(hidden), 1.0 / jnp.sqrt(hidden)),
        "b2": jax.random.uniform(k_b2, (1,), jnp.float32,
                                 -1.0 / jnp.sqrt(hidden), 1.0 / jnp.sqrt(hidden)),
    }


def prepare_params(params):
    """Pad / split / cast params into the kernel layout (done once, off the hot path)."""
    E = params["user_emb"].shape[1]
    H = params["w1"].shape[1]
    assert E <= EP and H == HIDDEN
    pad = EP - E
    return {
        "user_emb": jnp.pad(params["user_emb"], ((0, 0), (0, pad))).astype(jnp.bfloat16),
        "item_emb": jnp.pad(params["item_emb"], ((0, 0), (0, pad))).astype(jnp.bfloat16),
        "w1u": jnp.pad(params["w1"][:E], ((0, pad), (0, 0))).astype(jnp.bfloat16),
        "w1i": jnp.pad(params["w1"][E:], ((0, pad), (0, 0))).astype(jnp.bfloat16),
        "b1": params["b1"].reshape(1, H).astype(jnp.float32),
        "w2": params["w2"].reshape(H, 1).astype(jnp.float32),
        "b2": params["b2"].reshape(1, 1).astype(jnp.float32),
    }


def neural_cf_forward(user, item, prep, *, tb=TB):
    B = user.shape[0]
    nt = -(-B // tb)                 # cdiv
    b_pad = nt * tb

    # Pad the *index vectors* (not the gathered activations) so the gather
    # directly produces tile-aligned (b_pad, EP) bf16 activations.
    user_p = jnp.pad(user, (0, b_pad - B))
    item_p = jnp.pad(item, (0, b_pad - B))
    u = jnp.take(prep["user_emb"], user_p, axis=0)   # (b_pad, EP) bf16
    it = jnp.take(prep["item_emb"], item_p, axis=0)  # (b_pad, EP) bf16

    H = prep["b1"].shape[1]
    out = pl.pallas_call(
        ncf_mlp_kernel,
        out_shape=jax.ShapeDtypeStruct((nt, tb), jnp.float32),
        grid_spec=pltpu.PrefetchScalarGridSpec(
            num_scalar_prefetch=0,
            grid=(nt,),
            in_specs=[
                pl.BlockSpec((tb, EP), lambda t: (t, 0)),           # u tile
                pl.BlockSpec((tb, EP), lambda t: (t, 0)),           # i tile
                pl.BlockSpec((EP, H), lambda t: (0, 0)),            # w1u (resident)
                pl.BlockSpec((EP, H), lambda t: (0, 0)),            # w1i (resident)
                pl.BlockSpec((1, H), lambda t: (0, 0)),             # b1  (resident)
                pl.BlockSpec((H, 1), lambda t: (0, 0)),             # w2  (resident)
                pl.BlockSpec(memory_space=pltpu.MemorySpace.SMEM),  # b2 scalar
            ],
            out_specs=pl.BlockSpec((1, tb), lambda t: (t, 0)),      # lane-dense scores
        ),
        compiler_params=pltpu.CompilerParams(
            dimension_semantics=("parallel",),
        ),
    )(u, it, prep["w1u"], prep["w1i"], prep["b1"], prep["w2"], prep["b2"])

    return out.reshape(-1)[:B][:, None]              # (B, 1)


def reference_matched(user, item, prep):
    """Same math / same bf16 casts as the kernel, in plain JAX (tight check)."""
    u = jnp.take(prep["user_emb"], user, axis=0)
    i = jnp.take(prep["item_emb"], item, axis=0)
    h = (jnp.dot(u, prep["w1u"], preferred_element_type=jnp.float32)
         + jnp.dot(i, prep["w1i"], preferred_element_type=jnp.float32)
         + prep["b1"])
    h = jnp.maximum(h, 0.0)
    return jnp.sum(h * prep["w2"].T, axis=-1, keepdims=True) + prep["b2"]


def neural_cf_reference(user, item, params):
    """Original full-f32 PyTorch semantics (loose check vs the bf16 kernel)."""
    u = jnp.take(params["user_emb"], user, axis=0)
    i = jnp.take(params["item_emb"], item, axis=0)
    x = jnp.concatenate([u, i], axis=1)
    h = jnp.maximum(x @ params["w1"] + params["b1"], 0.0)
    return h @ params["w2"] + params["b2"]


if __name__ == "__main__":
    num_users, num_items, embedding_dim, batch = 32, 64, 50, 8

    key = jax.random.PRNGKey(0)
    k_params, k_user, k_item = jax.random.split(key, 3)

    params = init_params(k_params, num_users, num_items, embedding_dim)
    prep = prepare_params(params)
    user = jax.random.randint(k_user, (batch,), 0, num_users, dtype=jnp.int32)
    item = jax.random.randint(k_item, (batch,), 0, num_items, dtype=jnp.int32)

    out = neural_cf_forward(user, item, prep)
    out = jax.block_until_ready(out)
    assert out.shape == (batch, 1), out.shape

    ref_bf16 = reference_matched(user, item, prep)          # same precision path
    ref_f32 = neural_cf_reference(user, item, params)       # original semantics
    assert jnp.allclose(out, ref_bf16, atol=1e-3, rtol=1e-3), "mismatch vs matched ref"
    assert jnp.allclose(out, ref_f32, atol=5e-2), "mismatch vs f32 reference"

    print("KERNEL_OK")
</pallas_src>

<mosaic_0001>
module attributes {stable_mosaic.version = 11 : i64} {
  func.func @ncf_mlp_kernel(%arg0: i32, %arg1: memref<512x64xbf16, #tpu.memory_space<vmem>>, %arg2: memref<512x64xbf16, #tpu.memory_space<vmem>>, %arg3: memref<64x128xbf16, #tpu.memory_space<vmem>>, %arg4: memref<64x128xbf16, #tpu.memory_space<vmem>>, %arg5: memref<1x128xf32, #tpu.memory_space<vmem>>, %arg6: memref<128x1xf32, #tpu.memory_space<vmem>>, %arg7: memref<1x1xf32, #tpu.memory_space<smem>>, %arg8: memref<1x512xf32, #tpu.memory_space<vmem>>) attributes {dimension_semantics = [#tpu.dimension_semantics<parallel>], iteration_bounds = array<i64: 1>, scalar_prefetch = 0 : i64, scratch_operands = 0 : i64, tpu.core_type = #tpu.core_type<tc>, window_params = [{transform_indices = @transform_0, window_bounds = array<i64: 512, 64>}, {transform_indices = @transform_1, window_bounds = array<i64: 512, 64>}, {pipeline_mode = #tpu.pipeline_mode<synchronous>, transform_indices = @transform_2, window_bounds = array<i64: 64, 128>}, {pipeline_mode = #tpu.pipeline_mode<synchronous>, transform_indices = @transform_3, window_bounds = array<i64: 64, 128>}, {pipeline_mode = #tpu.pipeline_mode<synchronous>, transform_indices = @transform_4, window_bounds = array<i64: 1, 128>}, {pipeline_mode = #tpu.pipeline_mode<synchronous>, transform_indices = @transform_5, window_bounds = array<i64: 128, 1>}, {transform_indices = @transform_6, window_bounds = array<i64: 1, 1>}, {transform_indices = @transform_7, window_bounds = array<i64: 1, 512>}]} {
    %c0 = arith.constant 0 : index
    %c0_0 = arith.constant 0 : index
    %0 = vector.load %arg1[%c0, %c0_0] : memref<512x64xbf16, #tpu.memory_space<vmem>>, vector<512x64xbf16>
    %c0_1 = arith.constant 0 : index
    %c0_2 = arith.constant 0 : index
    %1 = vector.load %arg3[%c0_1, %c0_2] : memref<64x128xbf16, #tpu.memory_space<vmem>>, vector<64x128xbf16>
    %cst = arith.constant dense<0.000000e+00> : vector<512x128xf32>
    %2 = tpu.matmul %0, %1, %cst {dimension_numbers = #tpu.dot_dimension_numbers<[1], [0], [0], [1], [0, 0, 1, 1], [], []>} : vector<512x64xbf16>, vector<64x128xbf16>, vector<512x128xf32> -> vector<512x128xf32>
    %c0_3 = arith.constant 0 : index
    %c0_4 = arith.constant 0 : index
    %3 = vector.load %arg2[%c0_3, %c0_4] : memref<512x64xbf16, #tpu.memory_space<vmem>>, vector<512x64xbf16>
    %c0_5 = arith.constant 0 : index
    %c0_6 = arith.constant 0 : index
    %4 = vector.load %arg4[%c0_5, %c0_6] : memref<64x128xbf16, #tpu.memory_space<vmem>>, vector<64x128xbf16>
    %cst_7 = arith.constant dense<0.000000e+00> : vector<512x128xf32>
    %5 = tpu.matmul %3, %4, %cst_7 {dimension_numbers = #tpu.dot_dimension_numbers<[1], [0], [0], [1], [0, 0, 1, 1], [], []>} : vector<512x64xbf16>, vector<64x128xbf16>, vector<512x128xf32> -> vector<512x128xf32>
    %6 = arith.addf %2, %5 : vector<512x128xf32>
    %c0_8 = arith.constant 0 : index
    %c0_9 = arith.constant 0 : index
    %7 = vector.load %arg5[%c0_8, %c0_9] : memref<1x128xf32, #tpu.memory_space<vmem>>, vector<1x128xf32>
    %8 = vector.broadcast %7 : vector<1x128xf32> to vector<512x128xf32>
    %9 = arith.addf %6, %8 : vector<512x128xf32>
    %cst_10 = arith.constant 0.000000e+00 : f32
    %10 = vector.broadcast %cst_10 : f32 to vector<512x128xf32>
    %11 = arith.maximumf %9, %10 : vector<512x128xf32>
    %12 = tpu.transpose %11, [1, 0] : vector<512x128xf32> -> vector<128x512xf32>
    %c0_11 = arith.constant 0 : index
    %c0_12 = arith.constant 0 : index
    %13 = vector.load %arg6[%c0_11, %c0_12] : memref<128x1xf32, #tpu.memory_space<vmem>>, vector<128x1xf32>
    %14 = vector.broadcast %13 : vector<128x1xf32> to vector<128x512xf32>
    %15 = arith.mulf %12, %14 : vector<128x512xf32>
    %cst_13 = arith.constant dense<0.000000e+00> : vector<512xf32>
    %16 = vector.multi_reduction <add>, %15, %cst_13 [0] : vector<128x512xf32> to vector<512xf32>
    %17 = vector.shape_cast %16 : vector<512xf32> to vector<1x512xf32>
    %c0_14 = arith.constant 0 : index
    %c0_15 = arith.constant 0 : index
    %18 = memref.load %arg7[%c0_14, %c0_15] : memref<1x1xf32, #tpu.memory_space<smem>>
    %19 = vector.broadcast %18 : f32 to vector<1x512xf32>
    %20 = arith.addf %17, %19 : vector<1x512xf32>
    %c0_16 = arith.constant 0 : index
    %c0_17 = arith.constant 0 : index
    %21 = vector.load %arg8[%c0_16, %c0_17] : memref<1x512xf32, #tpu.memory_space<vmem>>, vector<1x512xf32>
    tpu.vector_store %arg8[%c0_16, %c0_17], %20 {strides = array<i32>} : memref<1x512xf32, #tpu.memory_space<vmem>>, vector<1x512xf32>,
    return
  }
  func.func @transform_0(%arg0: i32) -> (i32, i32) {
    %c0_i32 = arith.constant 0 : i32
    %c0_i32_0 = arith.constant 0 : i32
    return %arg0, %c0_i32 : i32, i32
  }
  func.func @transform_1(%arg0: i32) -> (i32, i32) {
    %c0_i32 = arith.constant 0 : i32
    %c0_i32_0 = arith.constant 0 : i32
    return %arg0, %c0_i32 : i32, i32
  }
  func.func @transform_2(%arg0: i32) -> (i32, i32) {
    %c0_i32 = arith.constant 0 : i32
    %c0_i32_0 = arith.constant 0 : i32
    %c0_i32_1 = arith.constant 0 : i32
    return %c0_i32, %c0_i32_0 : i32, i32
  }
  func.func @transform_3(%arg0: i32) -> (i32, i32) {
    %c0_i32 = arith.constant 0 : i32
    %c0_i32_0 = arith.constant 0 : i32
    %c0_i32_1 = arith.constant 0 : i32
    return %c0_i32, %c0_i32_0 : i32, i32
  }
  func.func @transform_4(%arg0: i32) -> (i32, i32) {
    %c0_i32 = arith.constant 0 : i32
    %c0_i32_0 = arith.constant 0 : i32
    %c0_i32_1 = arith.constant 0 : i32
    return %c0_i32, %c0_i32_0 : i32, i32
  }
  func.func @transform_5(%arg0: i32) -> (i32, i32) {
    %c0_i32 = arith.constant 0 : i32
    %c0_i32_0 = arith.constant 0 : i32
    %c0_i32_1 = arith.constant 0 : i32
    return %c0_i32, %c0_i32_0 : i32, i32
  }
  func.func @transform_6(%arg0: i32) -> (i32, i32) {
    %c0_i32 = arith.constant 0 : i32
    %c0_i32_0 = arith.constant 0 : i32
    %c0_i32_1 = arith.constant 0 : i32
    return %c0_i32, %c0_i32_0 : i32, i32
  }
  func.func @transform_7(%arg0: i32) -> (i32, i32) {
    %c0_i32 = arith.constant 0 : i32
    %c0_i32_0 = arith.constant 0 : i32
    return %arg0, %c0_i32 : i32, i32
  }
}

</mosaic_0001>

<llo_original>
// kernel: tpu_custom_call.1
$region0: #{tpu_custom_call.1}
  #allocation0 [shape = 'u32[]', space=smem, size = 0x4, offset = 0x4, fixed_abs, tag = 'smem constant byte address 0x4 - core index']
  #allocation1 [shape = 'u32[144,128]{1,0:T(1,128)}', space=vmem, size = 0x12000, scoped, tag = 'internal scratch']
  #allocation2 [shape = 'f32[1,1]{1,0:T(1,128)S(6)}', space=smem, size = 0x200, scoped, tag = 'scoped memory for tpu_custom_call.1']
  %s0 = inlined_call_operand.vmem [shape: bf16[512,64], index: 0, kind: input, shape index: {}]
  %s1 = inlined_call_operand.vmem [shape: bf16[512,64], index: 1, kind: input, shape index: {}]
  %s2 = inlined_call_operand.vmem [shape: bf16[64,128], index: 2, kind: input, shape index: {}]
  %s3 = inlined_call_operand.vmem [shape: bf16[64,128], index: 3, kind: input, shape index: {}]
  %s4 = inlined_call_operand.vmem [shape: f32[1,128], index: 4, kind: input, shape index: {}]
  %s5 = inlined_call_operand.vmem [shape: f32[128,1], index: 5, kind: input, shape index: {}]
  %s6 = inlined_call_operand.<no memory space> [shape: f32[1,1], index: 6, kind: input, shape index: {}]
  %s7 = inlined_call_operand.hbm [shape: f32[1,512], index: 7, kind: output, shape index: {}]
  %s8 = sld [smem:[#allocation0]]
  $region38: #{tpu_custom_call.1} parent=0
    _
  %s10 = ssub.s32 1, %s8
  %s11 = scalar_select 0, %s10, %s8
  %12 = sst [smem:[#allocation2]] %s6
  $region1: #{tpu_custom_call.1} parent=0
    #allocation3 [shape = 'u8[2048]{0}', space=vmem, size = 0x800, scoped, tag = 'output window, operand 0, single buffered']
    #allocation4 [shape = 's32[1]{0}', space=sflag, size = 0x4, scoped, tag = 'scoped memory for tpu_custom_call.1']
    %13 = vsyncpa [#allocation4], 0
    // Predicated region
    $region2: #{tpu_custom_call.1} parent=1 // pred_check
      _
    $region3: #{tpu_custom_call.1} parent=1 // pred_check_branch
      %15 = sbr.rel (0) target = $region5
    $region4: #{tpu_custom_call.1} parent=1 // pred_region
      _
    $region5: #{tpu_custom_call.1} parent=1 // pred_fallthru
      _
    // Predicated region
    $region6: #{tpu_custom_call.1} parent=1 // pred_check
      _
    $region7: #{tpu_custom_call.1} parent=1 // pred_check_branch
      %17 = sbr.rel (0) target = $region9
    $region8: #{tpu_custom_call.1} parent=1 // pred_region
      _
    $region9: #{tpu_custom_call.1} parent=1 // pred_fallthru
      _
    // Predicated region
    $region10: #{tpu_custom_call.1} parent=1 // pred_check
      _
    $region11: #{tpu_custom_call.1} parent=1 // pred_check_branch
      %19 = sbr.rel (0) target = $region13
    $region12: #{tpu_custom_call.1} parent=1 // pred_region
      _
    $region13: #{tpu_custom_call.1} parent=1 // pred_fallthru
      _
    // Predicated region
    $region14: #{tpu_custom_call.1} parent=1 // pred_check
      _
    $region15: #{tpu_custom_call.1} parent=1 // pred_check_branch
      %21 = sbr.rel (0) target = $region17
    $region16: #{tpu_custom_call.1} parent=1 // pred_region
      _
    $region17: #{tpu_custom_call.1} parent=1 // pred_fallthru
      _
    // Predicated region
    $region18: #{tpu_custom_call.1} parent=1 // pred_check
      _
    $region19: #{tpu_custom_call.1} parent=1 // pred_check_branch
      %23 = sbr.rel (0) target = $region21
    $region20: #{tpu_custom_call.1} parent=1 // pred_region
      _
    $region21: #{tpu_custom_call.1} parent=1 // pred_fallthru
      _
    // Predicated region
    $region22: #{tpu_custom_call.1} parent=1 // pred_check
      _
    $region23: #{tpu_custom_call.1} parent=1 // pred_check_branch
      %25 = sbr.rel (0) target = $region25
    $region24: #{tpu_custom_call.1} parent=1 // pred_region
      _
    $region25: #{tpu_custom_call.1} parent=1 // pred_fallthru
      _
    // Predicated region
    $region26: #{tpu_custom_call.1} parent=1 // pred_check
      _
    $region27: #{tpu_custom_call.1} parent=1 // pred_check_branch
      %27 = sbr.rel (0) target = $region29
    $region28: #{tpu_custom_call.1} parent=1 // pred_region
      _
    $region29: #{tpu_custom_call.1} parent=1 // pred_fallthru
      _
    %v29 = vld [vmem:[%s0] sm:$0xf]
    %v30 = vld [vmem:[%s0 + $0x4] sm:$0xf]
    %v31 = vld [vmem:[%s0 + $0x8] sm:$0xf]
    %v32 = vld [vmem:[%s0 + $0xc] sm:$0xf]
    %v33 = vld [vmem:[%s0 + $0x10] sm:$0xf]
    %v34 = vld [vmem:[%s0 + $0x14] sm:$0xf]
    %v35 = vld [vmem:[%s0 + $0x18] sm:$0xf]
    %v36 = vld [vmem:[%s0 + $0x1c] sm:$0xf]
    %v37 = vld [vmem:[%s0 + $0x20] sm:$0xf]
    %v38 = vld [vmem:[%s0 + $0x24] sm:$0xf]
    %v39 = vld [vmem:[%s0 + $0x28] sm:$0xf]
    %v40 = vld [vmem:[%s0 + $0x2c] sm:$0xf]
    %v41 = vld [vmem:[%s0 + $0x30] sm:$0xf]
    %v42 = vld [vmem:[%s0 + $0x34] sm:$0xf]
    %v43 = vld [vmem:[%s0 + $0x38] sm:$0xf]
    %v44 = vld [vmem:[%s0 + $0x3c] sm:$0xf]
    %v45 = vld [vmem:[%s0 + $0x40] sm:$0xf]
    %v46 = vld [vmem:[%s0 + $0x44] sm:$0xf]
    %v47 = vld [vmem:[%s0 + $0x48] sm:$0xf]
    %v48 = vld [vmem:[%s0 + $0x4c] sm:$0xf]
    %v49 = vld [vmem:[%s0 + $0x50] sm:$0xf]
    %v50 = vld [vmem:[%s0 + $0x54] sm:$0xf]
    %v51 = vld [vmem:[%s0 + $0x58] sm:$0xf]
    %v52 = vld [vmem:[%s0 + $0x5c] sm:$0xf]
    %v53 = vld [vmem:[%s0 + $0x60] sm:$0xf]
    %v54 = vld [vmem:[%s0 + $0x64] sm:$0xf]
    %v55 = vld [vmem:[%s0 + $0x68] sm:$0xf]
    %v56 = vld [vmem:[%s0 + $0x6c] sm:$0xf]
    %v57 = vld [vmem:[%s0 + $0x70] sm:$0xf]
    %v58 = vld [vmem:[%s0 + $0x74] sm:$0xf]
    %v59 = vld [vmem:[%s0 + $0x78] sm:$0xf]
    %v60 = vld [vmem:[%s0 + $0x7c] sm:$0xf]
    %v61 = vld [vmem:[%s0 + $0x80] sm:$0xf]
    %v62 = vld [vmem:[%s0 + $0x84] sm:$0xf]
    %v63 = vld [vmem:[%s0 + $0x88] sm:$0xf]
    %v64 = vld [vmem:[%s0 + $0x8c] sm:$0xf]
    %v65 = vld [vmem:[%s0 + $0x90] sm:$0xf]
    %v66 = vld [vmem:[%s0 + $0x94] sm:$0xf]
    %v67 = vld [vmem:[%s0 + $0x98] sm:$0xf]
    %v68 = vld [vmem:[%s0 + $0x9c] sm:$0xf]
    %v69 = vld [vmem:[%s0 + $0xa0] sm:$0xf]
    %v70 = vld [vmem:[%s0 + $0xa4] sm:$0xf]
    %v71 = vld [vmem:[%s0 + $0xa8] sm:$0xf]
    %v72 = vld [vmem:[%s0 + $0xac] sm:$0xf]
    %v73 = vld [vmem:[%s0 + $0xb0] sm:$0xf]
    %v74 = vld [vmem:[%s0 + $0xb4] sm:$0xf]
    %v75 = vld [vmem:[%s0 + $0xb8] sm:$0xf]
    %v76 = vld [vmem:[%s0 + $0xbc] sm:$0xf]
    %v77 = vld [vmem:[%s0 + $0xc0] sm:$0xf]
    %v78 = vld [vmem:[%s0 + $0xc4] sm:$0xf]
    %v79 = vld [vmem:[%s0 + $0xc8] sm:$0xf]
    %v80 = vld [vmem:[%s0 + $0xcc] sm:$0xf]
    %v81 = vld [vmem:[%s0 + $0xd0] sm:$0xf]
    %v82 = vld [vmem:[%s0 + $0xd4] sm:$0xf]
    %v83 = vld [vmem:[%s0 + $0xd8] sm:$0xf]
    %v84 = vld [vmem:[%s0 + $0xdc] sm:$0xf]
    %v85 = vld [vmem:[%s0 + $0xe0] sm:$0xf]
    %v86 = vld [vmem:[%s0 + $0xe4] sm:$0xf]
    %v87 = vld [vmem:[%s0 + $0xe8] sm:$0xf]
    %v88 = vld [vmem:[%s0 + $0xec] sm:$0xf]
    %v89 = vld [vmem:[%s0 + $0xf0] sm:$0xf]
    %v90 = vld [vmem:[%s0 + $0xf4] sm:$0xf]
    %v91 = vld [vmem:[%s0 + $0xf8] sm:$0xf]
    %v92 = vld [vmem:[%s0 + $0xfc] sm:$0xf]
    %v93 = vld [vmem:[%s2] sm:$0xf]
    %v94 = vld [vmem:[%s2 + $0x4] sm:$0xf]
    %v95 = vld [vmem:[%s2 + $0x8] sm:$0xf]
    %v96 = vld [vmem:[%s2 + $0xc] sm:$0xf]
    %v97 = vld [vmem:[%s2 + $0x10] sm:$0xf]
    %v98 = vld [vmem:[%s2 + $0x14] sm:$0xf]
    %v99 = vld [vmem:[%s2 + $0x18] sm:$0xf]
    %v100 = vld [vmem:[%s2 + $0x1c] sm:$0xf]
    %v101 = vld [vmem:[%s1] sm:$0xf]
    %v102 = vld [vmem:[%s1 + $0x4] sm:$0xf]
    %v103 = vld [vmem:[%s1 + $0x8] sm:$0xf]
    %v104 = vld [vmem:[%s1 + $0xc] sm:$0xf]
    %v105 = vld [vmem:[%s1 + $0x10] sm:$0xf]
    %v106 = vld [vmem:[%s1 + $0x14] sm:$0xf]
    %v107 = vld [vmem:[%s1 + $0x18] sm:$0xf]
    %v108 = vld [vmem:[%s1 + $0x1c] sm:$0xf]
    %v109 = vld [vmem:[%s1 + $0x20] sm:$0xf]
    %v110 = vld [vmem:[%s1 + $0x24] sm:$0xf]
    %v111 = vld [vmem:[%s1 + $0x28] sm:$0xf]
    %v112 = vld [vmem:[%s1 + $0x2c] sm:$0xf]
    %v113 = vld [vmem:[%s1 + $0x30] sm:$0xf]
    %v114 = vld [vmem:[%s1 + $0x34] sm:$0xf]
    %v115 = vld [vmem:[%s1 + $0x38] sm:$0xf]
    %v116 = vld [vmem:[%s1 + $0x3c] sm:$0xf]
    %v117 = vld [vmem:[%s1 + $0x40] sm:$0xf]
    %v118 = vld [vmem:[%s1 + $0x44] sm:$0xf]
    %v119 = vld [vmem:[%s1 + $0x48] sm:$0xf]
    %v120 = vld [vmem:[%s1 + $0x4c] sm:$0xf]
    %v121 = vld [vmem:[%s1 + $0x50] sm:$0xf]
    %v122 = vld [vmem:[%s1 + $0x54] sm:$0xf]
    %v123 = vld [vmem:[%s1 + $0x58] sm:$0xf]
    %v124 = vld [vmem:[%s1 + $0x5c] sm:$0xf]
    %v125 = vld [vmem:[%s1 + $0x60] sm:$0xf]
    %v126 = vld [vmem:[%s1 + $0x64] sm:$0xf]
    %v127 = vld [vmem:[%s1 + $0x68] sm:$0xf]
    %v128 = vld [vmem:[%s1 + $0x6c] sm:$0xf]
    %v129 = vld [vmem:[%s1 + $0x70] sm:$0xf]
    %v130 = vld [vmem:[%s1 + $0x74] sm:$0xf]
    %v131 = vld [vmem:[%s1 + $0x78] sm:$0xf]
    %v132 = vld [vmem:[%s1 + $0x7c] sm:$0xf]
    %v133 = vld [vmem:[%s1 + $0x80] sm:$0xf]
    %v134 = vld [vmem:[%s1 + $0x84] sm:$0xf]
    %v135 = vld [vmem:[%s1 + $0x88] sm:$0xf]
    %v136 = vld [vmem:[%s1 + $0x8c] sm:$0xf]
    %v137 = vld [vmem:[%s1 + $0x90] sm:$0xf]
    %v138 = vld [vmem:[%s1 + $0x94] sm:$0xf]
    %v139 = vld [vmem:[%s1 + $0x98] sm:$0xf]
    %v140 = vld [vmem:[%s1 + $0x9c] sm:$0xf]
    %v141 = vld [vmem:[%s1 + $0xa0] sm:$0xf]
    %v142 = vld [vmem:[%s1 + $0xa4] sm:$0xf]
    %v143 = vld [vmem:[%s1 + $0xa8] sm:$0xf]
    %v144 = vld [vmem:[%s1 + $0xac] sm:$0xf]
    %v145 = vld [vmem:[%s1 + $0xb0] sm:$0xf]
    %v146 = vld [vmem:[%s1 + $0xb4] sm:$0xf]
    %v147 = vld [vmem:[%s1 + $0xb8] sm:$0xf]
    %v148 = vld [vmem:[%s1 + $0xbc] sm:$0xf]
    %v149 = vld [vmem:[%s1 + $0xc0] sm:$0xf]
    %v150 = vld [vmem:[%s1 + $0xc4] sm:$0xf]
    %v151 = vld [vmem:[%s1 + $0xc8] sm:$0xf]
    %v152 = vld [vmem:[%s1 + $0xcc] sm:$0xf]
    %v153 = vld [vmem:[%s1 + $0xd0] sm:$0xf]
    %v154 = vld [vmem:[%s1 + $0xd4] sm:$0xf]
    %v155 = vld [vmem:[%s1 + $0xd8] sm:$0xf]
    %v156 = vld [vmem:[%s1 + $0xdc] sm:$0xf]
    %v157 = vld [vmem:[%s1 + $0xe0] sm:$0xf]
    %v158 = vld [vmem:[%s1 + $0xe4] sm:$0xf]
    %v159 = vld [vmem:[%s1 + $0xe8] sm:$0xf]
    %v160 = vld [vmem:[%s1 + $0xec] sm:$0xf]
    %v161 = vld [vmem:[%s1 + $0xf0] sm:$0xf]
    %v162 = vld [vmem:[%s1 + $0xf4] sm:$0xf]
    %v163 = vld [vmem:[%s1 + $0xf8] sm:$0xf]
    %v164 = vld [vmem:[%s1 + $0xfc] sm:$0xf]
    %v165 = vld [vmem:[%s3] sm:$0xf]
    %v166 = vld [vmem:[%s3 + $0x4] sm:$0xf]
    %v167 = vld [vmem:[%s3 + $0x8] sm:$0xf]
    %v168 = vld [vmem:[%s3 + $0xc] sm:$0xf]
    %v169 = vld [vmem:[%s3 + $0x10] sm:$0xf]
    %v170 = vld [vmem:[%s3 + $0x14] sm:$0xf]
    %v171 = vld [vmem:[%s3 + $0x18] sm:$0xf]
    %v172 = vld [vmem:[%s3 + $0x1c] sm:$0xf]
    %v237 = vunpack.c.l.b16 %v101
    %v238 = vunpack.c.l.b16 %v102
    %v239 = vunpack.c.l.b16 %v103
    %v240 = vunpack.c.l.b16 %v104
    %v241 = vunpack.c.l.b16 %v105
    %v242 = vunpack.c.l.b16 %v106
    %v243 = vunpack.c.l.b16 %v107
    %v244 = vunpack.c.l.b16 %v108
    %v245 = vunpack.c.l.b16 %v109
    %v246 = vunpack.c.l.b16 %v110
    %v247 = vunpack.c.l.b16 %v111
    %v248 = vunpack.c.l.b16 %v112
    %v249 = vunpack.c.l.b16 %v113
    %v250 = vunpack.c.l.b16 %v114
    %v251 = vunpack.c.l.b16 %v115
    %v252 = vunpack.c.l.b16 %v116
    %v253 = vunpack.c.l.b16 %v117
    %v254 = vunpack.c.l.b16 %v118
    %v255 = vunpack.c.l.b16 %v119
    %v256 = vunpack.c.l.b16 %v120
    %v257 = vunpack.c.l.b16 %v121
    %v258 = vunpack.c.l.b16 %v122
    %v259 = vunpack.c.l.b16 %v123
    %v260 = vunpack.c.l.b16 %v124
    %v261 = vunpack.c.l.b16 %v125
    %v262 = vunpack.c.l.b16 %v126
    %v263 = vunpack.c.l.b16 %v127
    %v264 = vunpack.c.l.b16 %v128
    %v265 = vunpack.c.l.b16 %v129
    %v266 = vunpack.c.l.b16 %v130
    %v267 = vunpack.c.l.b16 %v131
    %v268 = vunpack.c.l.b16 %v132
    %v269 = vunpack.c.l.b16 %v133
    %v270 = vunpack.c.l.b16 %v134
    %v271 = vunpack.c.l.b16 %v135
    %v272 = vunpack.c.l.b16 %v136
    %v273 = vunpack.c.l.b16 %v137
    %v274 = vunpack.c.l.b16 %v138
    %v275 = vunpack.c.l.b16 %v139
    %v276 = vunpack.c.l.b16 %v140
    %v277 = vunpack.c.l.b16 %v141
    %v278 = vunpack.c.l.b16 %v142
    %v279 = vunpack.c.l.b16 %v143
    %v280 = vunpack.c.l.b16 %v144
    %v281 = vunpack.c.l.b16 %v145
    %v282 = vunpack.c.l.b16 %v146
    %v283 = vunpack.c.l.b16 %v147
    %v284 = vunpack.c.l.b16 %v148
    %v285 = vunpack.c.l.b16 %v149
    %v286 = vunpack.c.l.b16 %v150
    %v287 = vunpack.c.l.b16 %v151
    %v288 = vunpack.c.l.b16 %v152
    %v289 = vunpack.c.l.b16 %v153
    %v290 = vunpack.c.l.b16 %v154
    %v291 = vunpack.c.l.b16 %v155
    %v292 = vunpack.c.l.b16 %v156
    %v293 = vunpack.c.l.b16 %v157
    %v294 = vunpack.c.l.b16 %v158
    %v295 = vunpack.c.l.b16 %v159
    %v296 = vunpack.c.l.b16 %v160
    %v297 = vunpack.c.l.b16 %v161
    %v298 = vunpack.c.l.b16 %v162
    %v299 = vunpack.c.l.b16 %v163
    %v300 = vunpack.c.l.b16 %v164
    %v301 = vpack.c.b16 %v238, %v237
    %v302 = vpack.c.b16 %v240, %v239
    %v303 = vpack.c.b16 %v242, %v241
    %v304 = vpack.c.b16 %v244, %v243
    %v305 = vpack.c.b16 %v246, %v245
    %v306 = vpack.c.b16 %v248, %v247
    %v307 = vpack.c.b16 %v250, %v249
    %v308 = vpack.c.b16 %v252, %v251
    %v309 = vpack.c.b16 %v254, %v253
    %v310 = vpack.c.b16 %v256, %v255
    %v311 = vpack.c.b16 %v258, %v257
    %v312 = vpack.c.b16 %v260, %v259
    %v313 = vpack.c.b16 %v262, %v261
    %v314 = vpack.c.b16 %v264, %v263
    %v315 = vpack.c.b16 %v266, %v265
    %v316 = vpack.c.b16 %v268, %v267
    %v317 = vpack.c.b16 %v270, %v269
    %v318 = vpack.c.b16 %v272, %v271
    %v319 = vpack.c.b16 %v274, %v273
    %v320 = vpack.c.b16 %v276, %v275
    %v321 = vpack.c.b16 %v278, %v277
    %v322 = vpack.c.b16 %v280, %v279
    %v323 = vpack.c.b16 %v282, %v281
    %v324 = vpack.c.b16 %v284, %v283
    %v325 = vpack.c.b16 %v286, %v285
    %v326 = vpack.c.b16 %v288, %v287
    %v327 = vpack.c.b16 %v290, %v289
    %v328 = vpack.c.b16 %v292, %v291
    %v329 = vpack.c.b16 %v294, %v293
    %v330 = vpack.c.b16 %v296, %v295
    %v331 = vpack.c.b16 %v298, %v297
    %v332 = vpack.c.b16 %v300, %v299
    %v341 = vunpack.c.l.b16 %v165
    %v342 = vunpack.c.l.b16 %v166
    %v343 = vunpack.c.l.b16 %v167
    %v344 = vunpack.c.l.b16 %v168
    %v345 = vunpack.c.l.b16 %v169
    %v346 = vunpack.c.l.b16 %v170
    %v347 = vunpack.c.l.b16 %v171
    %v348 = vunpack.c.l.b16 %v172
    %v349 = vpack.c.b16 %v342, %v341
    %v350 = vpack.c.b16 %v344, %v343
    %v351 = vpack.c.b16 %v346, %v345
    %v352 = vpack.c.b16 %v348, %v347
    %vm357 = vcmask 523264
    %v359 = vsel %vm357, %v301, 0
    %v362 = vsel %vm357, %v302, 0
    %v365 = vsel %vm357, %v303, 0
    %v368 = vsel %vm357, %v304, 0
    %v371 = vsel %vm357, %v305, 0
    %v374 = vsel %vm357, %v306, 0
    %v377 = vsel %vm357, %v307, 0
    %v380 = vsel %vm357, %v308, 0
    %v383 = vsel %vm357, %v309, 0
    %v386 = vsel %vm357, %v310, 0
    %v389 = vsel %vm357, %v311, 0
    %v392 = vsel %vm357, %v312, 0
    %v395 = vsel %vm357, %v313, 0
    %v398 = vsel %vm357, %v314, 0
    %v401 = vsel %vm357, %v315, 0
    %v404 = vsel %vm357, %v316, 0
    %v407 = vsel %vm357, %v317, 0
    %v410 = vsel %vm357, %v318, 0
    %v413 = vsel %vm357, %v319, 0
    %v416 = vsel %vm357, %v320, 0
    %v419 = vsel %vm357, %v321, 0
    %v422 = vsel %vm357, %v322, 0
    %v425 = vsel %vm357, %v323, 0
    %v428 = vsel %vm357, %v324, 0
    %v431 = vsel %vm357, %v325, 0
    %v434 = vsel %vm357, %v326, 0
    %v437 = vsel %vm357, %v327, 0
    %v440 = vsel %vm357, %v328, 0
    %v443 = vsel %vm357, %v329, 0
    %v446 = vsel %vm357, %v330, 0
    %v449 = vsel %vm357, %v331, 0
    %v452 = vsel %vm357, %v332, 0
    %454 = vmatprep.subr.bf16.mxu0 0
    %455 = vmatpush1.bf16.msra.mxu0 %v349
    %456 = vmatprep.subr.bf16.mxu0 0
    %457 = vmatpush1.bf16.msra.mxu0 %v350
    %458 = vmatprep.subr.bf16.mxu0 0
    %459 = vmatpush1.bf16.msra.mxu0 %v351
    %460 = vmatprep.subr.bf16.mxu0 0
    %461 = vmatpush1.bf16.msra.mxu0 %v352
    %462 = vmatprep.subr.bf16.mxu0 0
    %463 = vmatpush1.bf16.msra.mxu0 0
    %464 = vmatprep.subr.bf16.mxu0 0
    %465 = vmatpush1.bf16.msra.mxu0 0
    %466 = vmatprep.subr.bf16.mxu0 0
    %467 = vmatpush1.bf16.msra.mxu0 0
    %468 = vmatprep.subr.bf16.mxu0 0
    %469 = vmatpush1.bf16.msra.mxu0 0
    %470 = vmatprep.subr.bf16.mxu0 0
    %471 = vmatpush1.bf16.msra.mxu0 0
    %472 = vmatprep.subr.bf16.mxu0 0
    %473 = vmatpush1.bf16.msra.mxu0 0
    %474 = vmatprep.subr.bf16.mxu0 0
    %475 = vmatpush1.bf16.msra.mxu0 0
    %476 = vmatprep.subr.bf16.mxu0 0
    %477 = vmatpush1.bf16.msra.mxu0 0
    %478 = vmatprep.subr.bf16.mxu0 0
    %479 = vmatpush1.bf16.msra.mxu0 0
    %480 = vmatprep.subr.bf16.mxu0 0
    %481 = vmatpush1.bf16.msra.mxu0 0
    %482 = vmatprep.subr.bf16.mxu0 0
    %483 = vmatpush1.bf16.msra.mxu0 0
    %484 = vmatprep.subr.bf16.mxu0 0
    %485 = vmatpush1.bf16.msra.mxu0 0
    %486 = vmatprep.mubr.bf16.mxu0 0
    %487 = vmatmul.mubr.bf16.gmra.mrb[0].mxu0 %v359
    %v488 = vpop.f32.mrb[0].mxu0
    %v489 = vadd.f32 0.0, %v488
    %v490 = vpop.f32.mrb[0].mxu0
    %v491 = vpop.f32.mrb[0].mxu0
    %v492 = vadd.f32 0.0, %v491
    %v493 = vpop.f32.mrb[0].mxu0
    %494 = vmatprep.mubr.bf16.mxu0 0
    %495 = vmatmul.mubr.bf16.gmra.mrb[0].mxu0 %v362
    %v496 = vpop.f32.mrb[0].mxu0
    %v497 = vadd.f32 0.0, %v496
    %v498 = vpop.f32.mrb[0].mxu0
    %v499 = vpop.f32.mrb[0].mxu0
    %v500 = vadd.f32 0.0, %v499
    %v501 = vpop.f32.mrb[0].mxu0
    %502 = vmatprep.mubr.bf16.mxu0 0
    %503 = vmatmul.mubr.bf16.gmra.mrb[0].mxu0 %v365
    %v504 = vpop.f32.mrb[0].mxu0
    %v505 = vadd.f32 0.0, %v504
    %v506 = vpop.f32.mrb[0].mxu0
    %v507 = vpop.f32.mrb[0].mxu0
    %v508 = vadd.f32 0.0, %v507
    %v509 = vpop.f32.mrb[0].mxu0
    %510 = vmatprep.mubr.bf16.mxu0 0
    %511 = vmatmul.mubr.bf16.gmra.mrb[0].mxu0 %v368
    %v512 = vpop.f32.mrb[0].mxu0
    %v513 = vadd.f32 0.0, %v512
    %v514 = vpop.f32.mrb[0].mxu0
    %v515 = vpop.f32.mrb[0].mxu0
    %v516 = vadd.f32 0.0, %v515
    %v517 = vpop.f32.mrb[0].mxu0
    %518 = vmatprep.mubr.bf16.mxu0 0
    %519 = vmatmul.mubr.bf16.gmra.mrb[0].mxu0 %v371
    %v520 = vpop.f32.mrb[0].mxu0
    %v521 = vadd.f32 0.0, %v520
    %v522 = vpop.f32.mrb[0].mxu0
    %v523 = vpop.f32.mrb[0].mxu0
    %v524 = vadd.f32 0.0, %v523
    %v525 = vpop.f32.mrb[0].mxu0
    %526 = vmatprep.mubr.bf16.mxu0 0
    %527 = vmatmul.mubr.bf16.gmra.mrb[0].mxu0 %v374
    %v528 = vpop.f32.mrb[0].mxu0
    %v529 = vadd.f32 0.0, %v528
    %v530 = vpop.f32.mrb[0].mxu0
    %v531 = vpop.f32.mrb[0].mxu0
    %v532 = vadd.f32 0.0, %v531
    %v533 = vpop.f32.mrb[0].mxu0
    %534 = vmatprep.mubr.bf16.mxu0 0
    %535 = vmatmul.mubr.bf16.gmra.mrb[0].mxu0 %v377
    %v536 = vpop.f32.mrb[0].mxu0
    %v537 = vadd.f32 0.0, %v536
    %v538 = vpop.f32.mrb[0].mxu0
    %v539 = vpop.f32.mrb[0].mxu0
    %v540 = vadd.f32 0.0, %v539
    %v541 = vpop.f32.mrb[0].mxu0
    %542 = vmatprep.mubr.bf16.mxu0 0
    %543 = vmatmul.mubr.bf16.gmra.mrb[0].mxu0 %v380
    %v544 = vpop.f32.mrb[0].mxu0
    %v545 = vadd.f32 0.0, %v544
    %v546 = vpop.f32.mrb[0].mxu0
    %v547 = vpop.f32.mrb[0].mxu0
    %v548 = vadd.f32 0.0, %v547
    %v549 = vpop.f32.mrb[0].mxu0
    %550 = vmatprep.mubr.bf16.mxu0 0
    %551 = vmatmul.mubr.bf16.gmra.mrb[0].mxu0 %v383
    %v552 = vpop.f32.mrb[0].mxu0
    %v553 = vadd.f32 0.0, %v552
    %v554 = vpop.f32.mrb[0].mxu0
    %v555 = vpop.f32.mrb[0].mxu0
    %v556 = vadd.f32 0.0, %v555
    %v557 = vpop.f32.mrb[0].mxu0
    %558 = vmatprep.mubr.bf16.mxu0 0
    %559 = vmatmul.mubr.bf16.gmra.mrb[0].mxu0 %v386
    %v560 = vpop.f32.mrb[0].mxu0
    %v561 = vadd.f32 0.0, %v560
    %v562 = vpop.f32.mrb[0].mxu0
    %v563 = vpop.f32.mrb[0].mxu0
    %v564 = vadd.f32 0.0, %v563
    %v565 = vpop.f32.mrb[0].mxu0
    %566 = vmatprep.mubr.bf16.mxu0 0
    %567 = vmatmul.mubr.bf16.gmra.mrb[0].mxu0 %v389
    %v568 = vpop.f32.mrb[0].mxu0
    %v569 = vadd.f32 0.0, %v568
    %v570 = vpop.f32.mrb[0].mxu0
    %v571 = vpop.f32.mrb[0].mxu0
    %v572 = vadd.f32 0.0, %v571
    %v573 = vpop.f32.mrb[0].mxu0
    %574 = vmatprep.mubr.bf16.mxu0 0
    %575 = vmatmul.mubr.bf16.gmra.mrb[0].mxu0 %v392
    %v576 = vpop.f32.mrb[0].mxu0
    %v577 = vadd.f32 0.0, %v576
    %v578 = vpop.f32.mrb[0].mxu0
    %v579 = vpop.f32.mrb[0].mxu0
    %v580 = vadd.f32 0.0, %v579
    %v581 = vpop.f32.mrb[0].mxu0
    %582 = vmatprep.mubr.bf16.mxu0 0
    %583 = vmatmul.mubr.bf16.gmra.mrb[0].mxu0 %v395
    %v584 = vpop.f32.mrb[0].mxu0
    %v585 = vadd.f32 0.0, %v584
    %v586 = vpop.f32.mrb[0].mxu0
    %v587 = vpop.f32.mrb[0].mxu0
    %v588 = vadd.f32 0.0, %v587
    %v589 = vpop.f32.mrb[0].mxu0
    %590 = vmatprep.mubr.bf16.mxu0 0
    %591 = vmatmul.mubr.bf16.gmra.mrb[0].mxu0 %v398
    %v592 = vpop.f32.mrb[0].mxu0
    %v593 = vadd.f32 0.0, %v592
    %v594 = vpop.f32.mrb[0].mxu0
    %v595 = vpop.f32.mrb[0].mxu0
    %v596 = vadd.f32 0.0, %v595
    %v597 = vpop.f32.mrb[0].mxu0
    %598 = vmatprep.mubr.bf16.mxu0 0
    %599 = vmatmul.mubr.bf16.gmra.mrb[0].mxu0 %v401
    %v600 = vpop.f32.mrb[0].mxu0
    %v601 = vadd.f32 0.0, %v600
    %v602 = vpop.f32.mrb[0].mxu0
    %v603 = vpop.f32.mrb[0].mxu0
    %v604 = vadd.f32 0.0, %v603
    %v605 = vpop.f32.mrb[0].mxu0
    %606 = vmatprep.mubr.bf16.mxu0 0
    %607 = vmatmul.mubr.bf16.gmra.mrb[0].mxu0 %v404
    %v608 = vpop.f32.mrb[0].mxu0
    %v609 = vadd.f32 0.0, %v608
    %v610 = vpop.f32.mrb[0].mxu0
    %v611 = vpop.f32.mrb[0].mxu0
    %v612 = vadd.f32 0.0, %v611
    %v613 = vpop.f32.mrb[0].mxu0
    %614 = vmatprep.mubr.bf16.mxu0 0
    %615 = vmatmul.mubr.bf16.gmra.mrb[0].mxu0 %v407
    %v616 = vpop.f32.mrb[0].mxu0
    %v617 = vadd.f32 0.0, %v616
    %v618 = vpop.f32.mrb[0].mxu0
    %v619 = vpop.f32.mrb[0].mxu0
    %v620 = vadd.f32 0.0, %v619
    %v621 = vpop.f32.mrb[0].mxu0
    %622 = vmatprep.mubr.bf16.mxu0 0
    %623 = vmatmul.mubr.bf16.gmra.mrb[0].mxu0 %v410
    %v624 = vpop.f32.mrb[0].mxu0
    %v625 = vadd.f32 0.0, %v624
    %v626 = vpop.f32.mrb[0].mxu0
    %v627 = vpop.f32.mrb[0].mxu0
    %v628 = vadd.f32 0.0, %v627
    %v629 = vpop.f32.mrb[0].mxu0
    %630 = vmatprep.mubr.bf16.mxu0 0
    %631 = vmatmul.mubr.bf16.gmra.mrb[0].mxu0 %v413
    %v632 = vpop.f32.mrb[0].mxu0
    %v633 = vadd.f32 0.0, %v632
    %v634 = vpop.f32.mrb[0].mxu0
    %v635 = vpop.f32.mrb[0].mxu0
    %v636 = vadd.f32 0.0, %v635
    %v637 = vpop.f32.mrb[0].mxu0
    %638 = vmatprep.mubr.bf16.mxu0 0
    %639 = vmatmul.mubr.bf16.gmra.mrb[0].mxu0 %v416
    %v640 = vpop.f32.mrb[0].mxu0
    %v641 = vadd.f32 0.0, %v640
    %v642 = vpop.f32.mrb[0].mxu0
    %v643 = vpop.f32.mrb[0].mxu0
    %v644 = vadd.f32 0.0, %v643
    %v645 = vpop.f32.mrb[0].mxu0
    %646 = vmatprep.mubr.bf16.mxu0 0
    %647 = vmatmul.mubr.bf16.gmra.mrb[0].mxu0 %v419
    %v648 = vpop.f32.mrb[0].mxu0
    %v649 = vadd.f32 0.0, %v648
    %v650 = vpop.f32.mrb[0].mxu0
    %v651 = vpop.f32.mrb[0].mxu0
    %v652 = vadd.f32 0.0, %v651
    %v653 = vpop.f32.mrb[0].mxu0
    %654 = vmatprep.mubr.bf16.mxu0 0
    %655 = vmatmul.mubr.bf16.gmra.mrb[0].mxu0 %v422
    %v656 = vpop.f32.mrb[0].mxu0
    %v657 = vadd.f32 0.0, %v656
    %v658 = vpop.f32.mrb[0].mxu0
    %v659 = vpop.f32.mrb[0].mxu0
    %v660 = vadd.f32 0.0, %v659
    %v661 = vpop.f32.mrb[0].mxu0
    %662 = vmatprep.mubr.bf16.mxu0 0
    %663 = vmatmul.mubr.bf16.gmra.mrb[0].mxu0 %v425
    %v664 = vpop.f32.mrb[0].mxu0
    %v665 = vadd.f32 0.0, %v664
    %v666 = vpop.f32.mrb[0].mxu0
    %v667 = vpop.f32.mrb[0].mxu0
    %v668 = vadd.f32 0.0, %v667
    %v669 = vpop.f32.mrb[0].mxu0
    %670 = vmatprep.mubr.bf16.mxu0 0
    %671 = vmatmul.mubr.bf16.gmra.mrb[0].mxu0 %v428
    %v672 = vpop.f32.mrb[0].mxu0
    %v673 = vadd.f32 0.0, %v672
    %v674 = vpop.f32.mrb[0].mxu0
    %v675 = vpop.f32.mrb[0].mxu0
    %v676 = vadd.f32 0.0, %v675
    %v677 = vpop.f32.mrb[0].mxu0
    %678 = vmatprep.mubr.bf16.mxu0 0
    %679 = vmatmul.mubr.bf16.gmra.mrb[0].mxu0 %v431
    %v680 = vpop.f32.mrb[0].mxu0
    %v681 = vadd.f32 0.0, %v680
    %v682 = vpop.f32.mrb[0].mxu0
    %v683 = vpop.f32.mrb[0].mxu0
    %v684 = vadd.f32 0.0, %v683
    %v685 = vpop.f32.mrb[0].mxu0
    %686 = vmatprep.mubr.bf16.mxu0 0
    %687 = vmatmul.mubr.bf16.gmra.mrb[0].mxu0 %v434
    %v688 = vpop.f32.mrb[0].mxu0
    %v689 = vadd.f32 0.0, %v688
    %v690 = vpop.f32.mrb[0].mxu0
    %v691 = vpop.f32.mrb[0].mxu0
    %v692 = vadd.f32 0.0, %v691
    %v693 = vpop.f32.mrb[0].mxu0
    %694 = vmatprep.mubr.bf16.mxu0 0
    %695 = vmatmul.mubr.bf16.gmra.mrb[0].mxu0 %v437
    %v696 = vpop.f32.mrb[0].mxu0
    %v697 = vadd.f32 0.0, %v696
    %v698 = vpop.f32.mrb[0].mxu0
    %v699 = vpop.f32.mrb[0].mxu0
    %v700 = vadd.f32 0.0, %v699
    %v701 = vpop.f32.mrb[0].mxu0
    %702 = vmatprep.mubr.bf16.mxu0 0
    %703 = vmatmul.mubr.bf16.gmra.mrb[0].mxu0 %v440
    %v704 = vpop.f32.mrb[0].mxu0
    %v705 = vadd.f32 0.0, %v704
    %v706 = vpop.f32.mrb[0].mxu0
    %v707 = vpop.f32.mrb[0].mxu0
    %v708 = vadd.f32 0.0, %v707
    %v709 = vpop.f32.mrb[0].mxu0
    %710 = vmatprep.mubr.bf16.mxu0 0
    %711 = vmatmul.mubr.bf16.gmra.mrb[0].mxu0 %v443
    %v712 = vpop.f32.mrb[0].mxu0
    %v713 = vadd.f32 0.0, %v712
    %v714 = vpop.f32.mrb[0].mxu0
    %v715 = vpop.f32.mrb[0].mxu0
    %v716 = vadd.f32 0.0, %v715
    %v717 = vpop.f32.mrb[0].mxu0
    %718 = vmatprep.mubr.bf16.mxu0 0
    %719 = vmatmul.mubr.bf16.gmra.mrb[0].mxu0 %v446
    %v720 = vpop.f32.mrb[0].mxu0
    %v721 = vadd.f32 0.0, %v720
    %v722 = vpop.f32.mrb[0].mxu0
    %v723 = vpop.f32.mrb[0].mxu0
    %v724 = vadd.f32 0.0, %v723
    %v725 = vpop.f32.mrb[0].mxu0
    %726 = vmatprep.mubr.bf16.mxu0 0
    %727 = vmatmul.mubr.bf16.gmra.mrb[0].mxu0 %v449
    %v728 = vpop.f32.mrb[0].mxu0
    %v729 = vadd.f32 0.0, %v728
    %v730 = vpop.f32.mrb[0].mxu0
    %v731 = vpop.f32.mrb[0].mxu0
    %v732 = vadd.f32 0.0, %v731
    %v733 = vpop.f32.mrb[0].mxu0
    %734 = vmatprep.mubr.bf16.mxu0 0
    %735 = vmatmul.mubr.bf16.gmra.mrb[0].mxu0 %v452
    %v736 = vpop.f32.mrb[0].mxu0
    %v737 = vadd.f32 0.0, %v736
    %v738 = vpop.f32.mrb[0].mxu0
    %v739 = vpop.f32.mrb[0].mxu0
    %v740 = vadd.f32 0.0, %v739
    %v741 = vpop.f32.mrb[0].mxu0
    %742 = vdwg.mxu0
    %v807 = vunpack.c.l.b16 %v29
    %v808 = vunpack.c.l.b16 %v30
    %v809 = vunpack.c.l.b16 %v31
    %v810 = vunpack.c.l.b16 %v32
    %v811 = vunpack.c.l.b16 %v33
    %v812 = vunpack.c.l.b16 %v34
    %v813 = vunpack.c.l.b16 %v35
    %v814 = vunpack.c.l.b16 %v36
    %v815 = vunpack.c.l.b16 %v37
    %v816 = vunpack.c.l.b16 %v38
    %v817 = vunpack.c.l.b16 %v39
    %v818 = vunpack.c.l.b16 %v40
    %v819 = vunpack.c.l.b16 %v41
    %v820 = vunpack.c.l.b16 %v42
    %v821 = vunpack.c.l.b16 %v43
    %v822 = vunpack.c.l.b16 %v44
    %v823 = vunpack.c.l.b16 %v45
    %v824 = vunpack.c.l.b16 %v46
    %v825 = vunpack.c.l.b16 %v47
    %v826 = vunpack.c.l.b16 %v48
    %v827 = vunpack.c.l.b16 %v49
    %v828 = vunpack.c.l.b16 %v50
    %v829 = vunpack.c.l.b16 %v51
    %v830 = vunpack.c.l.b16 %v52
    %v831 = vunpack.c.l.b16 %v53
    %v832 = vunpack.c.l.b16 %v54
    %v833 = vunpack.c.l.b16 %v55
    %v834 = vunpack.c.l.b16 %v56
    %v835 = vunpack.c.l.b16 %v57
    %v836 = vunpack.c.l.b16 %v58
    %v837 = vunpack.c.l.b16 %v59
    %v838 = vunpack.c.l.b16 %v60
    %v839 = vunpack.c.l.b16 %v61
    %v840 = vunpack.c.l.b16 %v62
    %v841 = vunpack.c.l.b16 %v63
    %v842 = vunpack.c.l.b16 %v64
    %v843 = vunpack.c.l.b16 %v65
    %v844 = vunpack.c.l.b16 %v66
    %v845 = vunpack.c.l.b16 %v67
    %v846 = vunpack.c.l.b16 %v68
    %v847 = vunpack.c.l.b16 %v69
    %v848 = vunpack.c.l.b16 %v70
    %v849 = vunpack.c.l.b16 %v71
    %v850 = vunpack.c.l.b16 %v72
    %v851 = vunpack.c.l.b16 %v73
    %v852 = vunpack.c.l.b16 %v74
    %v853 = vunpack.c.l.b16 %v75
    %v854 = vunpack.c.l.b16 %v76
    %v855 = vunpack.c.l.b16 %v77
    %v856 = vunpack.c.l.b16 %v78
    %v857 = vunpack.c.l.b16 %v79
    %v858 = vunpack.c.l.b16 %v80
    %v859 = vunpack.c.l.b16 %v81
    %v860 = vunpack.c.l.b16 %v82
    %v861 = vunpack.c.l.b16 %v83
    %v862 = vunpack.c.l.b16 %v84
    %v863 = vunpack.c.l.b16 %v85
    %v864 = vunpack.c.l.b16 %v86
    %v865 = vunpack.c.l.b16 %v87
    %v866 = vunpack.c.l.b16 %v88
    %v867 = vunpack.c.l.b16 %v89
    %v868 = vunpack.c.l.b16 %v90
    %v869 = vunpack.c.l.b16 %v91
    %v870 = vunpack.c.l.b16 %v92
    %v871 = vpack.c.b16 %v808, %v807
    %v872 = vpack.c.b16 %v810, %v809
    %v873 = vpack.c.b16 %v812, %v811
    %v874 = vpack.c.b16 %v814, %v813
    %v875 = vpack.c.b16 %v816, %v815
    %v876 = vpack.c.b16 %v818, %v817
    %v877 = vpack.c.b16 %v820, %v819
    %v878 = vpack.c.b16 %v822, %v821
    %v879 = vpack.c.b16 %v824, %v823
    %v880 = vpack.c.b16 %v826, %v825
    %v881 = vpack.c.b16 %v828, %v827
    %v882 = vpack.c.b16 %v830, %v829
    %v883 = vpack.c.b16 %v832, %v831
    %v884 = vpack.c.b16 %v834, %v833
    %v885 = vpack.c.b16 %v836, %v835
    %v886 = vpack.c.b16 %v838, %v837
    %v887 = vpack.c.b16 %v840, %v839
    %v888 = vpack.c.b16 %v842, %v841
    %v889 = vpack.c.b16 %v844, %v843
    %v890 = vpack.c.b16 %v846, %v845
    %v891 = vpack.c.b16 %v848, %v847
    %v892 = vpack.c.b16 %v850, %v849
    %v893 = vpack.c.b16 %v852, %v851
    %v894 = vpack.c.b16 %v854, %v853
    %v895 = vpack.c.b16 %v856, %v855
    %v896 = vpack.c.b16 %v858, %v857
    %v897 = vpack.c.b16 %v860, %v859
    %v898 = vpack.c.b16 %v862, %v861
    %v899 = vpack.c.b16 %v864, %v863
    %v900 = vpack.c.b16 %v866, %v865
    %v901 = vpack.c.b16 %v868, %v867
    %v902 = vpack.c.b16 %v870, %v869
    %v911 = vunpack.c.l.b16 %v93
    %v912 = vunpack.c.l.b16 %v94
    %v913 = vunpack.c.l.b16 %v95
    %v914 = vunpack.c.l.b16 %v96
    %v915 = vunpack.c.l.b16 %v97
    %v916 = vunpack.c.l.b16 %v98
    %v917 = vunpack.c.l.b16 %v99
    %v918 = vunpack.c.l.b16 %v100
    %v919 = vpack.c.b16 %v912, %v911
    %v920 = vpack.c.b16 %v914, %v913
    %v921 = vpack.c.b16 %v916, %v915
    %v922 = vpack.c.b16 %v918, %v917
    %v928 = vsel %vm357, %v871, 0
    %v931 = vsel %vm357, %v872, 0
    %v934 = vsel %vm357, %v873, 0
    %v937 = vsel %vm357, %v874, 0
    %v940 = vsel %vm357, %v875, 0
    %v943 = vsel %vm357, %v876, 0
    %v946 = vsel %vm357, %v877, 0
    %v949 = vsel %vm357, %v878, 0
    %v952 = vsel %vm357, %v879, 0
    %v955 = vsel %vm357, %v880, 0
    %v958 = vsel %vm357, %v881, 0
    %v961 = vsel %vm357, %v882, 0
    %v964 = vsel %vm357, %v883, 0
    %v967 = vsel %vm357, %v884, 0
    %v970 = vsel %vm357, %v885, 0
    %v973 = vsel %vm357, %v886, 0
    %v976 = vsel %vm357, %v887, 0
    %v979 = vsel %vm357, %v888, 0
    %v982 = vsel %vm357, %v889, 0
    %v985 = vsel %vm357, %v890, 0
    %v988 = vsel %vm357, %v891, 0
    %v991 = vsel %vm357, %v892, 0
    %v994 = vsel %vm357, %v893, 0
    %v997 = vsel %vm357, %v894, 0
    %v1000 = vsel %vm357, %v895, 0
    %v1003 = vsel %vm357, %v896, 0
    %v1006 = vsel %vm357, %v897, 0
    %v1009 = vsel %vm357, %v898, 0
    %v1012 = vsel %vm357, %v899, 0
    %v1015 = vsel %vm357, %v900, 0
    %v1018 = vsel %vm357, %v901, 0
    %v1021 = vsel %vm357, %v902, 0
    %1023 = vmatprep.subr.bf16.mxu0 0
    %1024 = vmatpush1.bf16.msra.mxu0 %v919
    %1025 = vmatprep.subr.bf16.mxu0 0
    %1026 = vmatpush1.bf16.msra.mxu0 %v920
    %1027 = vmatprep.subr.bf16.mxu0 0
    %1028 = vmatpush1.bf16.msra.mxu0 %v921
    %1029 = vmatprep.subr.bf16.mxu0 0
    %1030 = vmatpush1.bf16.msra.mxu0 %v922
    %1031 = vmatprep.subr.bf16.mxu0 0
    %1032 = vmatpush1.bf16.msra.mxu0 0
    %1033 = vmatprep.subr.bf16.mxu0 0
    %1034 = vmatpush1.bf16.msra.mxu0 0
    %1035 = vmatprep.subr.bf16.mxu0 0
    %1036 = vmatpush1.bf16.msra.mxu0 0
    %1037 = vmatprep.subr.bf16.mxu0 0
    %1038 = vmatpush1.bf16.msra.mxu0 0
    %1039 = vmatprep.subr.bf16.mxu0 0
    %1040 = vmatpush1.bf16.msra.mxu0 0
    %1041 = vmatprep.subr.bf16.mxu0 0
    %1042 = vmatpush1.bf16.msra.mxu0 0
    %1043 = vmatprep.subr.bf16.mxu0 0
    %1044 = vmatpush1.bf16.msra.mxu0 0
    %1045 = vmatprep.subr.bf16.mxu0 0
    %1046 = vmatpush1.bf16.msra.mxu0 0
    %1047 = vmatprep.subr.bf16.mxu0 0
    %1048 = vmatpush1.bf16.msra.mxu0 0
    %1049 = vmatprep.subr.bf16.mxu0 0
    %1050 = vmatpush1.bf16.msra.mxu0 0
    %1051 = vmatprep.subr.bf16.mxu0 0
    %1052 = vmatpush1.bf16.msra.mxu0 0
    %1053 = vmatprep.subr.bf16.mxu0 0
    %1054 = vmatpush1.bf16.msra.mxu0 0
    %1055 = vmatprep.mubr.bf16.mxu0 0
    %1056 = vmatmul.mubr.bf16.gmra.mrb[0].mxu0 %v928
    %v1057 = vpop.f32.mrb[0].mxu0
    %v1058 = vadd.f32 %v489, %v1057
    %v1059 = vpop.f32.mrb[0].mxu0
    %v1060 = vpop.f32.mrb[0].mxu0
    %v1061 = vadd.f32 %v492, %v1060
    %v1062 = vpop.f32.mrb[0].mxu0
    %1063 = vmatprep.mubr.bf16.mxu0 0
    %1064 = vmatmul.mubr.bf16.gmra.mrb[0].mxu0 %v931
    %v1065 = vpop.f32.mrb[0].mxu0
    %v1066 = vadd.f32 %v497, %v1065
    %v1067 = vpop.f32.mrb[0].mxu0
    %v1068 = vpop.f32.mrb[0].mxu0
    %v1069 = vadd.f32 %v500, %v1068
    %v1070 = vpop.f32.mrb[0].mxu0
    %1071 = vmatprep.mubr.bf16.mxu0 0
    %1072 = vmatmul.mubr.bf16.gmra.mrb[0].mxu0 %v934
    %v1073 = vpop.f32.mrb[0].mxu0
    %v1074 = vadd.f32 %v505, %v1073
    %v1075 = vpop.f32.mrb[0].mxu0
    %v1076 = vpop.f32.mrb[0].mxu0
    %v1077 = vadd.f32 %v508, %v1076
    %v1078 = vpop.f32.mrb[0].mxu0
    %1079 = vmatprep.mubr.bf16.mxu0 0
    %1080 = vmatmul.mubr.bf16.gmra.mrb[0].mxu0 %v937
    %v1081 = vpop.f32.mrb[0].mxu0
    %v1082 = vadd.f32 %v513, %v1081
    %v1083 = vpop.f32.mrb[0].mxu0
    %v1084 = vpop.f32.mrb[0].mxu0
    %v1085 = vadd.f32 %v516, %v1084
    %v1086 = vpop.f32.mrb[0].mxu0
    %1087 = vmatprep.mubr.bf16.mxu0 0
    %1088 = vmatmul.mubr.bf16.gmra.mrb[0].mxu0 %v940
    %v1089 = vpop.f32.mrb[0].mxu0
    %v1090 = vadd.f32 %v521, %v1089
    %v1091 = vpop.f32.mrb[0].mxu0
    %v1092 = vpop.f32.mrb[0].mxu0
    %v1093 = vadd.f32 %v524, %v1092
    %v1094 = vpop.f32.mrb[0].mxu0
    %1095 = vmatprep.mubr.bf16.mxu0 0
    %1096 = vmatmul.mubr.bf16.gmra.mrb[0].mxu0 %v943
    %v1097 = vpop.f32.mrb[0].mxu0
    %v1098 = vadd.f32 %v529, %v1097
    %v1099 = vpop.f32.mrb[0].mxu0
    %v1100 = vpop.f32.mrb[0].mxu0
    %v1101 = vadd.f32 %v532, %v1100
    %v1102 = vpop.f32.mrb[0].mxu0
    %1103 = vmatprep.mubr.bf16.mxu0 0
    %1104 = vmatmul.mubr.bf16.gmra.mrb[0].mxu0 %v946
    %v1105 = vpop.f32.mrb[0].mxu0
    %v1106 = vadd.f32 %v537, %v1105
    %v1107 = vpop.f32.mrb[0].mxu0
    %v1108 = vpop.f32.mrb[0].mxu0
    %v1109 = vadd.f32 %v540, %v1108
    %v1110 = vpop.f32.mrb[0].mxu0
    %1111 = vmatprep.mubr.bf16.mxu0 0
    %1112 = vmatmul.mubr.bf16.gmra.mrb[0].mxu0 %v949
    %v1113 = vpop.f32.mrb[0].mxu0
    %v1114 = vadd.f32 %v545, %v1113
    %v1115 = vpop.f32.mrb[0].mxu0
    %v1116 = vpop.f32.mrb[0].mxu0
    %v1117 = vadd.f32 %v548, %v1116
    %v1118 = vpop.f32.mrb[0].mxu0
    %1119 = vmatprep.mubr.bf16.mxu0 0
    %1120 = vmatmul.mubr.bf16.gmra.mrb[0].mxu0 %v952
    %v1121 = vpop.f32.mrb[0].mxu0
    %v1122 = vadd.f32 %v553, %v1121
    %v1123 = vpop.f32.mrb[0].mxu0
    %v1124 = vpop.f32.mrb[0].mxu0
    %v1125 = vadd.f32 %v556, %v1124
    %v1126 = vpop.f32.mrb[0].mxu0
    %1127 = vmatprep.mubr.bf16.mxu0 0
    %1128 = vmatmul.mubr.bf16.gmra.mrb[0].mxu0 %v955
    %v1129 = vpop.f32.mrb[0].mxu0
    %v1130 = vadd.f32 %v561, %v1129
    %v1131 = vpop.f32.mrb[0].mxu0
    %v1132 = vpop.f32.mrb[0].mxu0
    %v1133 = vadd.f32 %v564, %v1132
    %v1134 = vpop.f32.mrb[0].mxu0
    %1135 = vmatprep.mubr.bf16.mxu0 0
    %1136 = vmatmul.mubr.bf16.gmra.mrb[0].mxu0 %v958
    %v1137 = vpop.f32.mrb[0].mxu0
    %v1138 = vadd.f32 %v569, %v1137
    %v1139 = vpop.f32.mrb[0].mxu0
    %v1140 = vpop.f32.mrb[0].mxu0
    %v1141 = vadd.f32 %v572, %v1140
    %v1142 = vpop.f32.mrb[0].mxu0
    %1143 = vmatprep.mubr.bf16.mxu0 0
    %1144 = vmatmul.mubr.bf16.gmra.mrb[0].mxu0 %v961
    %v1145 = vpop.f32.mrb[0].mxu0
    %v1146 = vadd.f32 %v577, %v1145
    %v1147 = vpop.f32.mrb[0].mxu0
    %v1148 = vpop.f32.mrb[0].mxu0
    %v1149 = vadd.f32 %v580, %v1148
    %v1150 = vpop.f32.mrb[0].mxu0
    %1151 = vmatprep.mubr.bf16.mxu0 0
    %1152 = vmatmul.mubr.bf16.gmra.mrb[0].mxu0 %v964
    %v1153 = vpop.f32.mrb[0].mxu0
    %v1154 = vadd.f32 %v585, %v1153
    %v1155 = vpop.f32.mrb[0].mxu0
    %v1156 = vpop.f32.mrb[0].mxu0
    %v1157 = vadd.f32 %v588, %v1156
    %v1158 = vpop.f32.mrb[0].mxu0
    %1159 = vmatprep.mubr.bf16.mxu0 0
    %1160 = vmatmul.mubr.bf16.gmra.mrb[0].mxu0 %v967
    %v1161 = vpop.f32.mrb[0].mxu0
    %v1162 = vadd.f32 %v593, %v1161
    %v1163 = vpop.f32.mrb[0].mxu0
    %v1164 = vpop.f32.mrb[0].mxu0
    %v1165 = vadd.f32 %v596, %v1164
    %v1166 = vpop.f32.mrb[0].mxu0
    %1167 = vmatprep.mubr.bf16.mxu0 0
    %1168 = vmatmul.mubr.bf16.gmra.mrb[0].mxu0 %v970
    %v1169 = vpop.f32.mrb[0].mxu0
    %v1170 = vadd.f32 %v601, %v1169
    %v1171 = vpop.f32.mrb[0].mxu0
    %v1172 = vpop.f32.mrb[0].mxu0
    %v1173 = vadd.f32 %v604, %v1172
    %v1174 = vpop.f32.mrb[0].mxu0
    %1175 = vmatprep.mubr.bf16.mxu0 0
    %1176 = vmatmul.mubr.bf16.gmra.mrb[0].mxu0 %v973
    %v1177 = vpop.f32.mrb[0].mxu0
    %v1178 = vadd.f32 %v609, %v1177
    %v1179 = vpop.f32.mrb[0].mxu0
    %v1180 = vpop.f32.mrb[0].mxu0
    %v1181 = vadd.f32 %v612, %v1180
    %v1182 = vpop.f32.mrb[0].mxu0
    %1183 = vmatprep.mubr.bf16.mxu0 0
    %1184 = vmatmul.mubr.bf16.gmra.mrb[0].mxu0 %v976
    %v1185 = vpop.f32.mrb[0].mxu0
    %v1186 = vadd.f32 %v617, %v1185
    %v1187 = vpop.f32.mrb[0].mxu0
    %v1188 = vpop.f32.mrb[0].mxu0
    %v1189 = vadd.f32 %v620, %v1188
    %v1190 = vpop.f32.mrb[0].mxu0
    %1191 = vmatprep.mubr.bf16.mxu0 0
    %1192 = vmatmul.mubr.bf16.gmra.mrb[0].mxu0 %v979
    %v1193 = vpop.f32.mrb[0].mxu0
    %v1194 = vadd.f32 %v625, %v1193
    %v1195 = vpop.f32.mrb[0].mxu0
    %v1196 = vpop.f32.mrb[0].mxu0
    %v1197 = vadd.f32 %v628, %v1196
    %v1198 = vpop.f32.mrb[0].mxu0
    %1199 = vmatprep.mubr.bf16.mxu0 0
    %1200 = vmatmul.mubr.bf16.gmra.mrb[0].mxu0 %v982
    %v1201 = vpop.f32.mrb[0].mxu0
    %v1202 = vadd.f32 %v633, %v1201
    %v1203 = vpop.f32.mrb[0].mxu0
    %v1204 = vpop.f32.mrb[0].mxu0
    %v1205 = vadd.f32 %v636, %v1204
    %v1206 = vpop.f32.mrb[0].mxu0
    %1207 = vmatprep.mubr.bf16.mxu0 0
    %1208 = vmatmul.mubr.bf16.gmra.mrb[0].mxu0 %v985
    %v1209 = vpop.f32.mrb[0].mxu0
    %v1210 = vadd.f32 %v641, %v1209
    %v1211 = vpop.f32.mrb[0].mxu0
    %v1212 = vpop.f32.mrb[0].mxu0
    %v1213 = vadd.f32 %v644, %v1212
    %v1214 = vpop.f32.mrb[0].mxu0
    %1215 = vmatprep.mubr.bf16.mxu0 0
    %1216 = vmatmul.mubr.bf16.gmra.mrb[0].mxu0 %v988
    %v1217 = vpop.f32.mrb[0].mxu0
    %v1218 = vadd.f32 %v649, %v1217
    %v1219 = vpop.f32.mrb[0].mxu0
    %v1220 = vpop.f32.mrb[0].mxu0
    %v1221 = vadd.f32 %v652, %v1220
    %v1222 = vpop.f32.mrb[0].mxu0
    %1223 = vmatprep.mubr.bf16.mxu0 0
    %1224 = vmatmul.mubr.bf16.gmra.mrb[0].mxu0 %v991
    %v1225 = vpop.f32.mrb[0].mxu0
    %v1226 = vadd.f32 %v657, %v1225
    %v1227 = vpop.f32.mrb[0].mxu0
    %v1228 = vpop.f32.mrb[0].mxu0
    %v1229 = vadd.f32 %v660, %v1228
    %v1230 = vpop.f32.mrb[0].mxu0
    %1231 = vmatprep.mubr.bf16.mxu0 0
    %1232 = vmatmul.mubr.bf16.gmra.mrb[0].mxu0 %v994
    %v1233 = vpop.f32.mrb[0].mxu0
    %v1234 = vadd.f32 %v665, %v1233
    %v1235 = vpop.f32.mrb[0].mxu0
    %v1236 = vpop.f32.mrb[0].mxu0
    %v1237 = vadd.f32 %v668, %v1236
    %v1238 = vpop.f32.mrb[0].mxu0
    %1239 = vmatprep.mubr.bf16.mxu0 0
    %1240 = vmatmul.mubr.bf16.gmra.mrb[0].mxu0 %v997
    %v1241 = vpop.f32.mrb[0].mxu0
    %v1242 = vadd.f32 %v673, %v1241
    %v1243 = vpop.f32.mrb[0].mxu0
    %v1244 = vpop.f32.mrb[0].mxu0
    %v1245 = vadd.f32 %v676, %v1244
    %v1246 = vpop.f32.mrb[0].mxu0
    %1247 = vmatprep.mubr.bf16.mxu0 0
    %1248 = vmatmul.mubr.bf16.gmra.mrb[0].mxu0 %v1000
    %v1249 = vpop.f32.mrb[0].mxu0
    %v1250 = vadd.f32 %v681, %v1249
    %v1251 = vpop.f32.mrb[0].mxu0
    %v1252 = vpop.f32.mrb[0].mxu0
    %v1253 = vadd.f32 %v684, %v1252
    %v1254 = vpop.f32.mrb[0].mxu0
    %1255 = vmatprep.mubr.bf16.mxu0 0
    %1256 = vmatmul.mubr.bf16.gmra.mrb[0].mxu0 %v1003
    %v1257 = vpop.f32.mrb[0].mxu0
    %v1258 = vadd.f32 %v689, %v1257
    %v1259 = vpop.f32.mrb[0].mxu0
    %v1260 = vpop.f32.mrb[0].mxu0
    %v1261 = vadd.f32 %v692, %v1260
    %v1262 = vpop.f32.mrb[0].mxu0
    %1263 = vmatprep.mubr.bf16.mxu0 0
    %1264 = vmatmul.mubr.bf16.gmra.mrb[0].mxu0 %v1006
    %v1265 = vpop.f32.mrb[0].mxu0
    %v1266 = vadd.f32 %v697, %v1265
    %v1267 = vpop.f32.mrb[0].mxu0
    %v1268 = vpop.f32.mrb[0].mxu0
    %v1269 = vadd.f32 %v700, %v1268
    %v1270 = vpop.f32.mrb[0].mxu0
    %1271 = vmatprep.mubr.bf16.mxu0 0
    %1272 = vmatmul.mubr.bf16.gmra.mrb[0].mxu0 %v1009
    %v1273 = vpop.f32.mrb[0].mxu0
    %v1274 = vadd.f32 %v705, %v1273
    %v1275 = vpop.f32.mrb[0].mxu0
    %v1276 = vpop.f32.mrb[0].mxu0
    %v1277 = vadd.f32 %v708, %v1276
    %v1278 = vpop.f32.mrb[0].mxu0
    %1279 = vmatprep.mubr.bf16.mxu0 0
    %1280 = vmatmul.mubr.bf16.gmra.mrb[0].mxu0 %v1012
    %v1281 = vpop.f32.mrb[0].mxu0
    %v1282 = vadd.f32 %v713, %v1281
    %v1283 = vpop.f32.mrb[0].mxu0
    %v1284 = vpop.f32.mrb[0].mxu0
    %v1285 = vadd.f32 %v716, %v1284
    %v1286 = vpop.f32.mrb[0].mxu0
    %1287 = vmatprep.mubr.bf16.mxu0 0
    %1288 = vmatmul.mubr.bf16.gmra.mrb[0].mxu0 %v1015
    %v1289 = vpop.f32.mrb[0].mxu0
    %v1290 = vadd.f32 %v721, %v1289
    %v1291 = vpop.f32.mrb[0].mxu0
    %v1292 = vpop.f32.mrb[0].mxu0
    %v1293 = vadd.f32 %v724, %v1292
    %v1294 = vpop.f32.mrb[0].mxu0
    %1295 = vmatprep.mubr.bf16.mxu0 0
    %1296 = vmatmul.mubr.bf16.gmra.mrb[0].mxu0 %v1018
    %v1297 = vpop.f32.mrb[0].mxu0
    %v1298 = vadd.f32 %v729, %v1297
    %v1299 = vpop.f32.mrb[0].mxu0
    %v1300 = vpop.f32.mrb[0].mxu0
    %v1301 = vadd.f32 %v732, %v1300
    %v1302 = vpop.f32.mrb[0].mxu0
    %1303 = vmatprep.mubr.bf16.mxu0 0
    %1304 = vmatmul.mubr.bf16.gmra.mrb[0].mxu0 %v1021
    %v1305 = vpop.f32.mrb[0].mxu0
    %v1306 = vadd.f32 %v737, %v1305
    %v1307 = vpop.f32.mrb[0].mxu0
    %v1308 = vpop.f32.mrb[0].mxu0
    %v1309 = vadd.f32 %v740, %v1308
    %v1310 = vpop.f32.mrb[0].mxu0
    %1311 = vdwg.mxu0
    %v1312 = vld [vmem:[%s4] sm:$0x1]
    %v1314 = vlaneseq
    %v1315 = vshrl.u32 %v1314, 7
    %v1316 = vsub.s32 0, %v1315
    %v1317 = vrot.slane %v1312, %v1316
    %v1319 = vadd.f32 %v1058, %v1317
    %v1320 = vadd.f32 %v1061, %v1317
    %v1321 = vadd.f32 %v1066, %v1317
    %v1322 = vadd.f32 %v1069, %v1317
    %v1323 = vadd.f32 %v1074, %v1317
    %v1324 = vadd.f32 %v1077, %v1317
    %v1325 = vadd.f32 %v1082, %v1317
    %v1326 = vadd.f32 %v1085, %v1317
    %v1327 = vadd.f32 %v1090, %v1317
    %v1328 = vadd.f32 %v1093, %v1317
    %v1329 = vadd.f32 %v1098, %v1317
    %v1330 = vadd.f32 %v1101, %v1317
    %v1331 = vadd.f32 %v1106, %v1317
    %v1332 = vadd.f32 %v1109, %v1317
    %v1333 = vadd.f32 %v1114, %v1317
    %v1334 = vadd.f32 %v1117, %v1317
    %v1335 = vadd.f32 %v1122, %v1317
    %v1336 = vadd.f32 %v1125, %v1317
    %v1337 = vadd.f32 %v1130, %v1317
    %v1338 = vadd.f32 %v1133, %v1317
    %v1339 = vadd.f32 %v1138, %v1317
    %v1340 = vadd.f32 %v1141, %v1317
    %v1341 = vadd.f32 %v1146, %v1317
    %v1342 = vadd.f32 %v1149, %v1317
    %v1343 = vadd.f32 %v1154, %v1317
    %v1344 = vadd.f32 %v1157, %v1317
    %v1345 = vadd.f32 %v1162, %v1317
    %v1346 = vadd.f32 %v1165, %v1317
    %v1347 = vadd.f32 %v1170, %v1317
    %v1348 = vadd.f32 %v1173, %v1317
    %v1349 = vadd.f32 %v1178, %v1317
    %v1350 = vadd.f32 %v1181, %v1317
    %v1351 = vadd.f32 %v1186, %v1317
    %v1352 = vadd.f32 %v1189, %v1317
    %v1353 = vadd.f32 %v1194, %v1317
    %v1354 = vadd.f32 %v1197, %v1317
    %v1355 = vadd.f32 %v1202, %v1317
    %v1356 = vadd.f32 %v1205, %v1317
    %v1357 = vadd.f32 %v1210, %v1317
    %v1358 = vadd.f32 %v1213, %v1317
    %v1359 = vadd.f32 %v1218, %v1317
    %v1360 = vadd.f32 %v1221, %v1317
    %v1361 = vadd.f32 %v1226, %v1317
    %v1362 = vadd.f32 %v1229, %v1317
    %v1363 = vadd.f32 %v1234, %v1317
    %v1364 = vadd.f32 %v1237, %v1317
    %v1365 = vadd.f32 %v1242, %v1317
    %v1366 = vadd.f32 %v1245, %v1317
    %v1367 = vadd.f32 %v1250, %v1317
    %v1368 = vadd.f32 %v1253, %v1317
    %v1369 = vadd.f32 %v1258, %v1317
    %v1370 = vadd.f32 %v1261, %v1317
    %v1371 = vadd.f32 %v1266, %v1317
    %v1372 = vadd.f32 %v1269, %v1317
    %v1373 = vadd.f32 %v1274, %v1317
    %v1374 = vadd.f32 %v1277, %v1317
    %v1375 = vadd.f32 %v1282, %v1317
    %v1376 = vadd.f32 %v1285, %v1317
    %v1377 = vadd.f32 %v1290, %v1317
    %v1378 = vadd.f32 %v1293, %v1317
    %v1379 = vadd.f32 %v1298, %v1317
    %v1380 = vadd.f32 %v1301, %v1317
    %v1381 = vadd.f32 %v1306, %v1317
    %v1382 = vadd.f32 %v1309, %v1317
    %v1383 = vmax.f32 %v1319, 0.0
    %v1384 = vmax.f32 %v1320, 0.0
    %v1385 = vmax.f32 %v1321, 0.0
    %v1386 = vmax.f32 %v1322, 0.0
    %v1387 = vmax.f32 %v1323, 0.0
    %v1388 = vmax.f32 %v1324, 0.0
    %v1389 = vmax.f32 %v1325, 0.0
    %v1390 = vmax.f32 %v1326, 0.0
    %v1391 = vmax.f32 %v1327, 0.0
    %v1392 = vmax.f32 %v1328, 0.0
    %v1393 = vmax.f32 %v1329, 0.0
    %v1394 = vmax.f32 %v1330, 0.0
    %v1395 = vmax.f32 %v1331, 0.0
    %v1396 = vmax.f32 %v1332, 0.0
    %v1397 = vmax.f32 %v1333, 0.0
    %v1398 = vmax.f32 %v1334, 0.0
    %v1399 = vmax.f32 %v1335, 0.0
    %v1400 = vmax.f32 %v1336, 0.0
    %v1401 = vmax.f32 %v1337, 0.0
    %v1402 = vmax.f32 %v1338, 0.0
    %v1403 = vmax.f32 %v1339, 0.0
    %v1404 = vmax.f32 %v1340, 0.0
    %v1405 = vmax.f32 %v1341, 0.0
    %v1406 = vmax.f32 %v1342, 0.0
    %v1407 = vmax.f32 %v1343, 0.0
    %v1408 = vmax.f32 %v1344, 0.0
    %v1409 = vmax.f32 %v1345, 0.0
    %v1410 = vmax.f32 %v1346, 0.0
    %v1411 = vmax.f32 %v1347, 0.0
    %v1412 = vmax.f32 %v1348, 0.0
    %v1413 = vmax.f32 %v1349, 0.0
    %v1414 = vmax.f32 %v1350, 0.0
    %v1415 = vmax.f32 %v1351, 0.0
    %v1416 = vmax.f32 %v1352, 0.0
    %v1417 = vmax.f32 %v1353, 0.0
    %v1418 = vmax.f32 %v1354, 0.0
    %v1419 = vmax.f32 %v1355, 0.0
    %v1420 = vmax.f32 %v1356, 0.0
    %v1421 = vmax.f32 %v1357, 0.0
    %v1422 = vmax.f32 %v1358, 0.0
    %v1423 = vmax.f32 %v1359, 0.0
    %v1424 = vmax.f32 %v1360, 0.0
    %v1425 = vmax.f32 %v1361, 0.0
    %v1426 = vmax.f32 %v1362, 0.0
    %v1427 = vmax.f32 %v1363, 0.0
    %v1428 = vmax.f32 %v1364, 0.0
    %v1429 = vmax.f32 %v1365, 0.0
    %v1430 = vmax.f32 %v1366, 0.0
    %v1431 = vmax.f32 %v1367, 0.0
    %v1432 = vmax.f32 %v1368, 0.0
    %v1433 = vmax.f32 %v1369, 0.0
    %v1434 = vmax.f32 %v1370, 0.0
    %v1435 = vmax.f32 %v1371, 0.0
    %v1436 = vmax.f32 %v1372, 0.0
    %v1437 = vmax.f32 %v1373, 0.0
    %v1438 = vmax.f32 %v1374, 0.0
    %v1439 = vmax.f32 %v1375, 0.0
    %v1440 = vmax.f32 %v1376, 0.0
    %v1441 = vmax.f32 %v1377, 0.0
    %v1442 = vmax.f32 %v1378, 0.0
    %v1443 = vmax.f32 %v1379, 0.0
    %v1444 = vmax.f32 %v1380, 0.0
    %v1445 = vmax.f32 %v1381, 0.0
    %v1446 = vmax.f32 %v1382, 0.0
    %1447 = vxpose.xlu0.b32.start [1/16] %v1383, 128
    %1448 = vxpose.xlu0.b32.cont [2/16] %v1384, 128
    %1449 = vxpose.xlu0.b32.cont [3/16] %v1385, 128
    %1450 = vxpose.xlu0.b32.cont [4/16] %v1386, 128
    %1451 = vxpose.xlu0.b32.cont [5/16] %v1387, 128
    %1452 = vxpose.xlu0.b32.cont [6/16] %v1388, 128
    %1453 = vxpose.xlu0.b32.cont [7/16] %v1389, 128
    %1454 = vxpose.xlu0.b32.cont [8/16] %v1390, 128
    %1455 = vxpose.xlu0.b32.cont [9/16] %v1391, 128
    %1456 = vxpose.xlu0.b32.cont [10/16] %v1392, 128
    %1457 = vxpose.xlu0.b32.cont [11/16] %v1393, 128
    %1458 = vxpose.xlu0.b32.cont [12/16] %v1394, 128
    %1459 = vxpose.xlu0.b32.cont [13/16] %v1395, 128
    %1460 = vxpose.xlu0.b32.cont [14/16] %v1396, 128
    %1461 = vxpose.xlu0.b32.cont [15/16] %v1397, 128
    %1462 = vxpose.xlu0.b32.end [16/16] %v1398, 128
    %v1463 = vpop.trf.xlu0
    %v1464 = vpop.trf.xlu0
    %v1465 = vpop.trf.xlu0
    %v1466 = vpop.trf.xlu0
    %v1467 = vpop.trf.xlu0
    %v1468 = vpop.trf.xlu0
    %v1469 = vpop.trf.xlu0
    %v1470 = vpop.trf.xlu0
    %v1471 = vpop.trf.xlu0
    %v1472 = vpop.trf.xlu0
    %v1473 = vpop.trf.xlu0
    %v1474 = vpop.trf.xlu0
    %v1475 = vpop.trf.xlu0
    %v1476 = vpop.trf.xlu0
    %v1477 = vpop.trf.xlu0
    %v1478 = vpop.trf.xlu0
    %1479 = vxpose.xlu0.b32.start [1/16] %v1399, 128
    %1480 = vxpose.xlu0.b32.cont [2/16] %v1400, 128
    %1481 = vxpose.xlu0.b32.cont [3/16] %v1401, 128
    %1482 = vxpose.xlu0.b32.cont [4/16] %v1402, 128
    %1483 = vxpose.xlu0.b32.cont [5/16] %v1403, 128
    %1484 = vxpose.xlu0.b32.cont [6/16] %v1404, 128
    %1485 = vxpose.xlu0.b32.cont [7/16] %v1405, 128
    %1486 = vxpose.xlu0.b32.cont [8/16] %v1406, 128
    %1487 = vxpose.xlu0.b32.cont [9/16] %v1407, 128
    %1488 = vxpose.xlu0.b32.cont [10/16] %v1408, 128
    %1489 = vxpose.xlu0.b32.cont [11/16] %v1409, 128
    %1490 = vxpose.xlu0.b32.cont [12/16] %v1410, 128
    %1491 = vxpose.xlu0.b32.cont [13/16] %v1411, 128
    %1492 = vxpose.xlu0.b32.cont [14/16] %v1412, 128
    %1493 = vxpose.xlu0.b32.cont [15/16] %v1413, 128
    %1494 = vxpose.xlu0.b32.end [16/16] %v1414, 128
    %v1495 = vpop.trf.xlu0
    %v1496 = vpop.trf.xlu0
    %v1497 = vpop.trf.xlu0
    %v1498 = vpop.trf.xlu0
    %v1499 = vpop.trf.xlu0
    %v1500 = vpop.trf.xlu0
    %v1501 = vpop.trf.xlu0
    %v1502 = vpop.trf.xlu0
    %v1503 = vpop.trf.xlu0
    %v1504 = vpop.trf.xlu0
    %v1505 = vpop.trf.xlu0
    %v1506 = vpop.trf.xlu0
    %v1507 = vpop.trf.xlu0
    %v1508 = vpop.trf.xlu0
    %v1509 = vpop.trf.xlu0
    %v1510 = vpop.trf.xlu0
    %1511 = vxpose.xlu0.b32.start [1/16] %v1415, 128
    %1512 = vxpose.xlu0.b32.cont [2/16] %v1416, 128
    %1513 = vxpose.xlu0.b32.cont [3/16] %v1417, 128
    %1514 = vxpose.xlu0.b32.cont [4/16] %v1418, 128
    %1515 = vxpose.xlu0.b32.cont [5/16] %v1419, 128
    %1516 = vxpose.xlu0.b32.cont [6/16] %v1420, 128
    %1517 = vxpose.xlu0.b32.cont [7/16] %v1421, 128
    %1518 = vxpose.xlu0.b32.cont [8/16] %v1422, 128
    %1519 = vxpose.xlu0.b32.cont [9/16] %v1423, 128
    %1520 = vxpose.xlu0.b32.cont [10/16] %v1424, 128
    %1521 = vxpose.xlu0.b32.cont [11/16] %v1425, 128
    %1522 = vxpose.xlu0.b32.cont [12/16] %v1426, 128
    %1523 = vxpose.xlu0.b32.cont [13/16] %v1427, 128
    %1524 = vxpose.xlu0.b32.cont [14/16] %v1428, 128
    %1525 = vxpose.xlu0.b32.cont [15/16] %v1429, 128
    %1526 = vxpose.xlu0.b32.end [16/16] %v1430, 128
    %v1527 = vpop.trf.xlu0
    %v1528 = vpop.trf.xlu0
    %v1529 = vpop.trf.xlu0
    %v1530 = vpop.trf.xlu0
    %v1531 = vpop.trf.xlu0
    %v1532 = vpop.trf.xlu0
    %v1533 = vpop.trf.xlu0
    %v1534 = vpop.trf.xlu0
    %v1535 = vpop.trf.xlu0
    %v1536 = vpop.trf.xlu0
    %v1537 = vpop.trf.xlu0
    %v1538 = vpop.trf.xlu0
    %v1539 = vpop.trf.xlu0
    %v1540 = vpop.trf.xlu0
    %v1541 = vpop.trf.xlu0
    %v1542 = vpop.trf.xlu0
    %1543 = vxpose.xlu0.b32.start [1/16] %v1431, 128
    %1544 = vxpose.xlu0.b32.cont [2/16] %v1432, 128
    %1545 = vxpose.xlu0.b32.cont [3/16] %v1433, 128
    %1546 = vxpose.xlu0.b32.cont [4/16] %v1434, 128
    %1547 = vxpose.xlu0.b32.cont [5/16] %v1435, 128
    %1548 = vxpose.xlu0.b32.cont [6/16] %v1436, 128
    %1549 = vxpose.xlu0.b32.cont [7/16] %v1437, 128
    %1550 = vxpose.xlu0.b32.cont [8/16] %v1438, 128
    %1551 = vxpose.xlu0.b32.cont [9/16] %v1439, 128
    %1552 = vxpose.xlu0.b32.cont [10/16] %v1440, 128
    %1553 = vxpose.xlu0.b32.cont [11/16] %v1441, 128
    %1554 = vxpose.xlu0.b32.cont [12/16] %v1442, 128
    %1555 = vxpose.xlu0.b32.cont [13/16] %v1443, 128
    %1556 = vxpose.xlu0.b32.cont [14/16] %v1444, 128
    %1557 = vxpose.xlu0.b32.cont [15/16] %v1445, 128
    %1558 = vxpose.xlu0.b32.end [16/16] %v1446, 128
    %v1559 = vpop.trf.xlu0
    %v1560 = vpop.trf.xlu0
    %v1561 = vpop.trf.xlu0
    %v1562 = vpop.trf.xlu0
    %v1563 = vpop.trf.xlu0
    %v1564 = vpop.trf.xlu0
    %v1565 = vpop.trf.xlu0
    %v1566 = vpop.trf.xlu0
    %v1567 = vpop.trf.xlu0
    %v1568 = vpop.trf.xlu0
    %v1569 = vpop.trf.xlu0
    %v1570 = vpop.trf.xlu0
    %v1571 = vpop.trf.xlu0
    %v1572 = vpop.trf.xlu0
    %v1573 = vpop.trf.xlu0
    %v1574 = vpop.trf.xlu0
    %v1575 = vld [vmem:[%s5] sm:$0xff]
    %v1576 = vld [vmem:[%s5 + $0x8] sm:$0xff]
    %v1577 = vld [vmem:[%s5 + $0x10] sm:$0xff]
    %v1578 = vld [vmem:[%s5 + $0x18] sm:$0xff]
    %v1579 = vld [vmem:[%s5 + $0x20] sm:$0xff]
    %v1580 = vld [vmem:[%s5 + $0x28] sm:$0xff]
    %v1581 = vld [vmem:[%s5 + $0x30] sm:$0xff]
    %v1582 = vld [vmem:[%s5 + $0x38] sm:$0xff]
    %v1583 = vld [vmem:[%s5 + $0x40] sm:$0xff]
    %v1584 = vld [vmem:[%s5 + $0x48] sm:$0xff]
    %v1585 = vld [vmem:[%s5 + $0x50] sm:$0xff]
    %v1586 = vld [vmem:[%s5 + $0x58] sm:$0xff]
    %v1587 = vld [vmem:[%s5 + $0x60] sm:$0xff]
    %v1588 = vld [vmem:[%s5 + $0x68] sm:$0xff]
    %v1589 = vld [vmem:[%s5 + $0x70] sm:$0xff]
    %v1590 = vld [vmem:[%s5 + $0x78] sm:$0xff]
    %1592 = vset.pattern.permute.xlu0 0
    %1593 = vperm.xlu0 %1592, %v1575
    %v1594 = vpop.permute.xlu0 %1593
    %1597 = vset.pattern.permute.xlu0 0
    %1598 = vperm.xlu0 %1597, %v1576
    %v1599 = vpop.permute.xlu0 %1598
    %1602 = vset.pattern.permute.xlu0 0
    %1603 = vperm.xlu0 %1602, %v1577
    %v1604 = vpop.permute.xlu0 %1603
    %1607 = vset.pattern.permute.xlu0 0
    %1608 = vperm.xlu0 %1607, %v1578
    %v1609 = vpop.permute.xlu0 %1608
    %1612 = vset.pattern.permute.xlu0 0
    %1613 = vperm.xlu0 %1612, %v1579
    %v1614 = vpop.permute.xlu0 %1613
    %1617 = vset.pattern.permute.xlu0 0
    %1618 = vperm.xlu0 %1617, %v1580
    %v1619 = vpop.permute.xlu0 %1618
    %1622 = vset.pattern.permute.xlu0 0
    %1623 = vperm.xlu0 %1622, %v1581
    %v1624 = vpop.permute.xlu0 %1623
    %1627 = vset.pattern.permute.xlu0 0
    %1628 = vperm.xlu0 %1627, %v1582
    %v1629 = vpop.permute.xlu0 %1628
    %1632 = vset.pattern.permute.xlu0 0
    %1633 = vperm.xlu0 %1632, %v1583
    %v1634 = vpop.permute.xlu0 %1633
    %1637 = vset.pattern.permute.xlu0 0
    %1638 = vperm.xlu0 %1637, %v1584
    %v1639 = vpop.permute.xlu0 %1638
    %1642 = vset.pattern.permute.xlu0 0
    %1643 = vperm.xlu0 %1642, %v1585
    %v1644 = vpop.permute.xlu0 %1643
    %1647 = vset.pattern.permute.xlu0 0
    %1648 = vperm.xlu0 %1647, %v1586
    %v1649 = vpop.permute.xlu0 %1648
    %1652 = vset.pattern.permute.xlu0 0
    %1653 = vperm.xlu0 %1652, %v1587
    %v1654 = vpop.permute.xlu0 %1653
    %1657 = vset.pattern.permute.xlu0 0
    %1658 = vperm.xlu0 %1657, %v1588
    %v1659 = vpop.permute.xlu0 %1658
    %1662 = vset.pattern.permute.xlu0 0
    %1663 = vperm.xlu0 %1662, %v1589
    %v1664 = vpop.permute.xlu0 %1663
    %1667 = vset.pattern.permute.xlu0 0
    %1668 = vperm.xlu0 %1667, %v1590
    %v1669 = vpop.permute.xlu0 %1668
    %v1671 = vmul.f32 %v1463, %v1594
    %v1672 = vmul.f32 %v1495, %v1594
    %v1673 = vmul.f32 %v1527, %v1594
    %v1674 = vmul.f32 %v1559, %v1594
    %v1675 = vmul.f32 %v1464, %v1599
    %v1676 = vmul.f32 %v1496, %v1599
    %v1677 = vmul.f32 %v1528, %v1599
    %v1678 = vmul.f32 %v1560, %v1599
    %v1679 = vmul.f32 %v1465, %v1604
    %v1680 = vmul.f32 %v1497, %v1604
    %v1681 = vmul.f32 %v1529, %v1604
    %v1682 = vmul.f32 %v1561, %v1604
    %v1683 = vmul.f32 %v1466, %v1609
    %v1684 = vmul.f32 %v1498, %v1609
    %v1685 = vmul.f32 %v1530, %v1609
    %v1686 = vmul.f32 %v1562, %v1609
    %v1687 = vmul.f32 %v1467, %v1614
    %v1688 = vmul.f32 %v1499, %v1614
    %v1689 = vmul.f32 %v1531, %v1614
    %v1690 = vmul.f32 %v1563, %v1614
    %v1691 = vmul.f32 %v1468, %v1619
    %v1692 = vmul.f32 %v1500, %v1619
    %v1693 = vmul.f32 %v1532, %v1619
    %v1694 = vmul.f32 %v1564, %v1619
    %v1695 = vmul.f32 %v1469, %v1624
    %v1696 = vmul.f32 %v1501, %v1624
    %v1697 = vmul.f32 %v1533, %v1624
    %v1698 = vmul.f32 %v1565, %v1624
    %v1699 = vmul.f32 %v1470, %v1629
    %v1700 = vmul.f32 %v1502, %v1629
    %v1701 = vmul.f32 %v1534, %v1629
    %v1702 = vmul.f32 %v1566, %v1629
    %v1703 = vmul.f32 %v1471, %v1634
    %v1704 = vmul.f32 %v1503, %v1634
    %v1705 = vmul.f32 %v1535, %v1634
    %v1706 = vmul.f32 %v1567, %v1634
    %v1707 = vmul.f32 %v1472, %v1639
    %v1708 = vmul.f32 %v1504, %v1639
    %v1709 = vmul.f32 %v1536, %v1639
    %v1710 = vmul.f32 %v1568, %v1639
    %v1711 = vmul.f32 %v1473, %v1644
    %v1712 = vmul.f32 %v1505, %v1644
    %v1713 = vmul.f32 %v1537, %v1644
    %v1714 = vmul.f32 %v1569, %v1644
    %v1715 = vmul.f32 %v1474, %v1649
    %v1716 = vmul.f32 %v1506, %v1649
    %v1717 = vmul.f32 %v1538, %v1649
    %v1718 = vmul.f32 %v1570, %v1649
    %v1719 = vmul.f32 %v1475, %v1654
    %v1720 = vmul.f32 %v1507, %v1654
    %v1721 = vmul.f32 %v1539, %v1654
    %v1722 = vmul.f32 %v1571, %v1654
    %v1723 = vmul.f32 %v1476, %v1659
    %v1724 = vmul.f32 %v1508, %v1659
    %v1725 = vmul.f32 %v1540, %v1659
    %v1726 = vmul.f32 %v1572, %v1659
    %v1727 = vmul.f32 %v1477, %v1664
    %v1728 = vmul.f32 %v1509, %v1664
    %v1729 = vmul.f32 %v1541, %v1664
    %v1730 = vmul.f32 %v1573, %v1664
    %v1731 = vmul.f32 %v1478, %v1669
    %v1732 = vmul.f32 %v1510, %v1669
    %v1733 = vmul.f32 %v1542, %v1669
    %v1734 = vmul.f32 %v1574, %v1669
    %v1735 = vadd.f32 %v1671, %v1675
    %v1736 = vadd.f32 %v1735, %v1679
    %v1737 = vadd.f32 %v1736, %v1683
    %v1738 = vadd.f32 %v1737, %v1687
    %v1739 = vadd.f32 %v1738, %v1691
    %v1740 = vadd.f32 %v1739, %v1695
    %v1741 = vadd.f32 %v1740, %v1699
    %v1742 = vadd.f32 %v1741, %v1703
    %v1743 = vadd.f32 %v1742, %v1707
    %v1744 = vadd.f32 %v1743, %v1711
    %v1745 = vadd.f32 %v1744, %v1715
    %v1746 = vadd.f32 %v1745, %v1719
    %v1747 = vadd.f32 %v1746, %v1723
    %v1748 = vadd.f32 %v1747, %v1727
    %v1749 = vadd.f32 %v1748, %v1731
    %v1750 = vrot.slane %v1749, 4
    %v1751 = vadd.f32 %v1749, %v1750
    %v1752 = vrot.slane %v1751, 2
    %v1753 = vadd.f32 %v1751, %v1752
    %v1754 = vrot.slane %v1753, 1
    %v1755 = vadd.f32 %v1753, %v1754
    %v1756 = vadd.f32 %v1672, %v1676
    %v1757 = vadd.f32 %v1756, %v1680
    %v1758 = vadd.f32 %v1757, %v1684
    %v1759 = vadd.f32 %v1758, %v1688
    %v1760 = vadd.f32 %v1759, %v1692
    %v1761 = vadd.f32 %v1760, %v1696
    %v1762 = vadd.f32 %v1761, %v1700
    %v1763 = vadd.f32 %v1762, %v1704
    %v1764 = vadd.f32 %v1763, %v1708
    %v1765 = vadd.f32 %v1764, %v1712
    %v1766 = vadd.f32 %v1765, %v1716
    %v1767 = vadd.f32 %v1766, %v1720
    %v1768 = vadd.f32 %v1767, %v1724
    %v1769 = vadd.f32 %v1768, %v1728
    %v1770 = vadd.f32 %v1769, %v1732
    %v1771 = vrot.slane %v1770, 4
    %v1772 = vadd.f32 %v1770, %v1771
    %v1773 = vrot.slane %v1772, 2
    %v1774 = vadd.f32 %v1772, %v1773
    %v1775 = vrot.slane %v1774, 1
    %v1776 = vadd.f32 %v1774, %v1775
    %v1777 = vadd.f32 %v1673, %v1677
    %v1778 = vadd.f32 %v1777, %v1681
    %v1779 = vadd.f32 %v1778, %v1685
    %v1780 = vadd.f32 %v1779, %v1689
    %v1781 = vadd.f32 %v1780, %v1693
    %v1782 = vadd.f32 %v1781, %v1697
    %v1783 = vadd.f32 %v1782, %v1701
    %v1784 = vadd.f32 %v1783, %v1705
    %v1785 = vadd.f32 %v1784, %v1709
    %v1786 = vadd.f32 %v1785, %v1713
    %v1787 = vadd.f32 %v1786, %v1717
    %v1788 = vadd.f32 %v1787, %v1721
    %v1789 = vadd.f32 %v1788, %v1725
    %v1790 = vadd.f32 %v1789, %v1729
    %v1791 = vadd.f32 %v1790, %v1733
    %v1792 = vrot.slane %v1791, 4
    %v1793 = vadd.f32 %v1791, %v1792
    %v1794 = vrot.slane %v1793, 2
    %v1795 = vadd.f32 %v1793, %v1794
    %v1796 = vrot.slane %v1795, 1
    %v1797 = vadd.f32 %v1795, %v1796
    %v1798 = vadd.f32 %v1674, %v1678
    %v1799 = vadd.f32 %v1798, %v1682
    %v1800 = vadd.f32 %v1799, %v1686
    %v1801 = vadd.f32 %v1800, %v1690
    %v1802 = vadd.f32 %v1801, %v1694
    %v1803 = vadd.f32 %v1802, %v1698
    %v1804 = vadd.f32 %v1803, %v1702
    %v1805 = vadd.f32 %v1804, %v1706
    %v1806 = vadd.f32 %v1805, %v1710
    %v1807 = vadd.f32 %v1806, %v1714
    %v1808 = vadd.f32 %v1807, %v1718
    %v1809 = vadd.f32 %v1808, %v1722
    %v1810 = vadd.f32 %v1809, %v1726
    %v1811 = vadd.f32 %v1810, %v1730
    %v1812 = vadd.f32 %v1811, %v1734
    %v1813 = vrot.slane %v1812, 4
    %v1814 = vadd.f32 %v1812, %v1813
    %v1815 = vrot.slane %v1814, 2
    %v1816 = vadd.f32 %v1814, %v1815
    %v1817 = vrot.slane %v1816, 1
    %v1818 = vadd.f32 %v1816, %v1817
    %s1819 = sld [smem:[#allocation2]]
    %v1820 = vstv %s1819
    %v1821 = vadd.f32 %v1755, %v1820
    %v1822 = vadd.f32 %v1776, %v1820
    %v1823 = vadd.f32 %v1797, %v1820
    %v1824 = vadd.f32 %v1818, %v1820
    %v1829 = vcombine.low %v1821, %v1822
    %v1830 = vcombine.low %v1823, %v1824
    %v1832 = vunpack.c.l.s4 1966171168
    %v1833 = vunpack.c.0.s8 %v1832
    %v1834 = vlaneseq
    %v1835 = vshrl.u32 %v1834, 7
    %v1836 = vsub.s32 %v1833, %v1835
    %v1837 = vrot.slane %v1829, %v1836
    %v1839 = vunpack.c.l.s4 1966171168
    %v1840 = vunpack.c.0.s8 %v1839
    %v1841 = vlaneseq
    %v1842 = vshrl.u32 %v1841, 7
    %v1843 = vsub.s32 %v1840, %v1842
    %v1844 = vrot.slane %v1830, %v1843
    %v1845 = vcombine.low %v1837, %v1844
    %v1847 = vunpack.c.l.s4 1966171168
    %v1848 = vunpack.c.0.s8 %v1847
    %v1849 = vlaneseq
    %v1850 = vshrl.u32 %v1849, 7
    %v1851 = vsub.s32 %v1848, %v1850
    %v1852 = vrot.slane %v1845, %v1851
    %v1854 = vlaneseq
    %vm1855 = vcmp.ge.s32.totalorder %v1854, 0
    %vm1856 = vcmp.lt.s32.totalorder %v1854, 512
    %vm1857 = vmand %vm1855, %vm1856
    %1858 = vst.msk [vmem:[#allocation3] sm:$0xf] %vm1857, %v1852
    // Predicated region
    $region30: #{tpu_custom_call.1} parent=1 // pred_check
      _
    $region31: #{tpu_custom_call.1} parent=1 // pred_check_branch
      %1860 = sbr.rel (0) target = $region33
    $region32: #{tpu_custom_call.1} parent=1 // pred_region
      %s1862 = ssub.s32 64, 64
      %1863 = vsyncadd [#allocation4], %s1862
      %s1865 = sshll.u32 [#allocation3], 4
      %s1866 = int_to_ptr.vmem [resolvable:$true] %s1865
      %1868 = dma.vmem_to_hbm [thread:$0]  %s1866, 64, %s7, [#allocation4]
    $region33: #{tpu_custom_call.1} parent=1 // pred_fallthru
      _
    // Predicated region
    $region34: #{tpu_custom_call.1} parent=1 // pred_check
      _
    $region35: #{tpu_custom_call.1} parent=1 // pred_check_branch
      %1870 = sbr.rel (0) target = $region37
    $region36: #{tpu_custom_call.1} parent=1 // pred_region
      %1871 = dma.done [#allocation4], 64
    $region37: #{tpu_custom_call.1} parent=1 // pred_fallthru
      _
    %1872 = vsyncpa [#allocation4], 1

</llo_original>
